<compile_context>
chip_gen: v7x
topology: tpu7x:2x2x1
jax: 0.10.0
libtpu: 0.0.40
codegen_flags: <defaults>
</compile_context>

<pallas_src>
import functools

import jax
import jax.numpy as jnp
from jax.experimental import pallas as pl
from jax.experimental.pallas import tpu as pltpu


# Patch-row threshold below which a conv's matmul runs as a plain XLA dot
# inside the same jit program instead of a pallas_call (launch overhead is
# much larger than the MXU work at these shapes; see perf review).
_PALLAS_MIN_M = 33


def _round_up(x, m):
    return ((x + m - 1) // m) * m


# ----------------------------------------------------------------------------
# Pallas kernel: fused (bf16 x bf16 -> f32 acc) matmul + bias + optional ReLU,
# bf16 lane-dense output tiles.  Full K in one shot (no K grid / accumulator).
# ----------------------------------------------------------------------------

def _matmul_bias_kernel(a_ref, w_ref, b_ref, o_ref, *, relu):
    acc = jnp.dot(a_ref[...], w_ref[...], preferred_element_type=jnp.float32)
    y = acc + b_ref[...]
    if relu:
        y = jnp.maximum(y, 0.0)
    o_ref[...] = y.astype(o_ref.dtype)


def matmul_bias_act(a, w, bias, relu):
    """(Mp, Np) bf16 = [relu](a @ w + bias).

    a:    (M, Kp)  bf16 activations (K already padded to Kp).
    w:    (Kp, Np) bf16 weights, padded & BN-folded at parameter-build time.
    bias: (1, Np)  f32.
    """
    M, Kp = a.shape
    Kw, Np = w.shape
    assert Kp == Kw and Np % 128 == 0

    # M tiling: bf16 vregs pack 16 sublanes -> TM multiple of 16.
    TM = 256 if M > 256 else _round_up(max(M, 1), 16)
    Mp = _round_up(M, TM)

    # Lane-dense N tiles.  Prefer TN=256 only if the grid keeps >= 2 steps so
    # both v7x TensorCores get work; otherwise drop to TN=128, and if the grid
    # would still collapse to a single step, split M instead.
    TN = 256 if (Np % 256 == 0 and (Mp // TM) * (Np // 256) >= 2) else 128
    if (Mp // TM) * (Np // TN) < 2 and M > 16:
        TM = _round_up(-(-M // 2), 16)
        Mp = _round_up(M, TM)

    if Mp > M:
        a = jnp.pad(a, ((0, Mp - M), (0, 0)))

    grid = (Mp // TM, Np // TN)
    # TODO(synk): at large M (e.g. 224x224 inputs) make the N axis the outer
    # grid axis so the full weight set is not re-streamed once per M tile.
    return pl.pallas_call(
        functools.partial(_matmul_bias_kernel, relu=relu),
        out_shape=jax.ShapeDtypeStruct((Mp, Np), jnp.bfloat16),
        grid_spec=pltpu.PrefetchScalarGridSpec(
            num_scalar_prefetch=0,
            grid=grid,
            in_specs=[
                pl.BlockSpec((TM, Kp), lambda i, j: (i, 0)),   # activations
                pl.BlockSpec((Kp, TN), lambda i, j: (0, j)),   # bf16 weights
                pl.BlockSpec((1, TN), lambda i, j: (0, j)),    # f32 bias
            ],
            out_specs=pl.BlockSpec((TM, TN), lambda i, j: (i, j)),
        ),
        compiler_params=pltpu.CompilerParams(
            dimension_semantics=("parallel", "parallel"),
            vmem_limit_bytes=32 * 1024 * 1024,
        ),
    )(a, w, bias)


def _dense(a, prep, relu):
    """[relu](a @ W_folded + bias), sliced back to (M, cout)."""
    M, K = a.shape
    Kp, Np = prep["w"].shape
    if K < Kp:
        a = jnp.pad(a, ((0, 0), (0, Kp - K)))
    a = a.astype(jnp.bfloat16)          # no-op: activations are bf16 already
    if M < _PALLAS_MIN_M:
        # Tiny-M fallback: plain XLA dot in the same program; a pallas_call
        # here would be pure launch overhead (perf review).
        y = jnp.dot(a, prep["w"], preferred_element_type=jnp.float32)
        y = y + prep["b"]
        if relu:
            y = jnp.maximum(y, 0.0)
        out = y.astype(jnp.bfloat16)
    else:
        out = matmul_bias_act(a, prep["w"], prep["b"], relu)
    return out[:M, :prep["cout"]]


# ----------------------------------------------------------------------------
# Plain-JAX glue: im2col, maxpool, layer wrappers
# ----------------------------------------------------------------------------

def _im2col(x, kh, kw, stride, pad):
    """x: (N,H,W,C) NHWC bf16 -> (N*Ho*Wo, kh*kw*C) patch matrix."""
    N, H, W, C = x.shape
    Ho = (H + 2 * pad - kh) // stride + 1
    Wo = (W + 2 * pad - kw) // stride + 1
    if kh == 1 and kw == 1 and stride == 1 and pad == 0:
        return x.reshape(N * H * W, C), Ho, Wo
    xp = jnp.pad(x, ((0, 0), (pad, pad), (pad, pad), (0, 0)))
    cols = []
    for i in range(kh):
        for j in range(kw):
            cols.append(xp[:, i:i + stride * Ho:stride,
                           j:j + stride * Wo:stride, :])
    patches = jnp.stack(cols, axis=3)                  # (N,Ho,Wo,kh*kw,C)
    # TODO(synk): at large resolutions, replace this HBM-materialised im2col
    # with a kh*kw grid axis whose index_map offsets into the padded input.
    return patches.reshape(N * Ho * Wo, kh * kw * C), Ho, Wo


def conv_fwd(prep, x, relu=True):
    """Prepared Conv(+BN folded)+bias(+ReLU).  x: (N,H,W,Cin) NHWC bf16."""
    a, Ho, Wo = _im2col(x, prep["kh"], prep["kw"], prep["stride"], prep["pad"])
    out = _dense(a, prep, relu)
    return out.reshape(x.shape[0], Ho, Wo, prep["cout"])


def maxpool3x3(x, stride):
    """MaxPool2d(kernel_size=3, stride=stride, padding=1) in NHWC (bf16).

    Running maximum over the 9 shifted slices — XLA fuses this; no stacked
    9x tensor in HBM and no Pallas launch.
    """
    N, H, W, C = x.shape
    Ho = (H + 2 - 3) // stride + 1
    Wo = (W + 2 - 3) // stride + 1
    xp = jnp.pad(x, ((0, 0), (1, 1), (1, 1), (0, 0)),
                 constant_values=-jnp.inf)
    out = None
    for i in range(3):
        for j in range(3):
            s = xp[:, i:i + stride * Ho:stride, j:j + stride * Wo:stride, :]
            out = s if out is None else jnp.maximum(out, s)
    return out


def inception_fwd(p, x):
    # Fused 1x1 branches (b1 | b2a | b3a) in ONE matmul, then split.
    fused = conv_fwd(p["fused1x1"], x)
    d1, dm3, dm5 = p["splits"]
    o1 = fused[..., :d1]
    m3 = fused[..., d1:d1 + dm3]
    m5 = fused[..., d1 + dm3:d1 + dm3 + dm5]
    o2 = conv_fwd(p["b2b"], m3)
    o3 = conv_fwd(p["b3b"], m5)
    o4 = conv_fwd(p["b4"], maxpool3x3(x, stride=1))
    return jnp.concatenate([o1, o2, o3, o4], axis=-1)


# ----------------------------------------------------------------------------
# Parameter construction (deterministic, synthetic, pre-folded + pre-packed)
# ----------------------------------------------------------------------------

_BN_EPS = 1e-5


def _pack_matmul(wm, bias, kh, kw, stride, pad, cin, cout):
    """Pad (K,N) weight to (Kp,Np) multiples of 128, store bf16; pad f32 bias."""
    K, N = wm.shape
    Kp = _round_up(K, 128)
    Np = _round_up(N, 128)
    w_p = jnp.pad(wm, ((0, Kp - K), (0, Np - N))).astype(jnp.bfloat16)
    b_p = jnp.pad(bias, (0, Np - N)).reshape(1, Np).astype(jnp.float32)
    return {"w": w_p, "b": b_p, "kh": kh, "kw": kw, "stride": stride,
            "pad": pad, "cin": cin, "cout": cout}


def _convbn_folded(key, cin, cout, k):
    """Synthetic ConvBN params with BN (eval-mode) scale folded into weights."""
    fan_in = k * k * cin
    w = jax.random.normal(key, (k, k, cin, cout), jnp.float32) / jnp.sqrt(
        jnp.float32(fan_in))
    gamma = jnp.ones((cout,), jnp.float32)
    beta = jnp.zeros((cout,), jnp.float32)
    rm = jnp.zeros((cout,), jnp.float32)
    rv = jnp.ones((cout,), jnp.float32)
    scale = gamma / jnp.sqrt(rv + _BN_EPS)
    bias = beta - rm * scale
    wm = w.reshape(k * k * cin, cout) * scale[None, :]
    return wm, bias


def _prep_convbn(key, cin, cout, k, stride=1, pad=0):
    wm, b = _convbn_folded(key, cin, cout, k)
    return _pack_matmul(wm, b, k, k, stride, pad, cin, cout)


def _prep_inception(key, in_dim, out_dim, mid3, out3, mid5, out5, pool):
    ks = jax.random.split(key, 6)
    w1, b1 = _convbn_folded(ks[0], in_dim, out_dim, 1)
    w2a, b2a = _convbn_folded(ks[1], in_dim, mid3, 1)
    w3a, b3a = _convbn_folded(ks[3], in_dim, mid5, 1)
    fused_w = jnp.concatenate([w1, w2a, w3a], axis=1)
    fused_b = jnp.concatenate([b1, b2a, b3a])
    return {
        "fused1x1": _pack_matmul(fused_w, fused_b, 1, 1, 1, 0,
                                 in_dim, out_dim + mid3 + mid5),
        "splits": (out_dim, mid3, mid5),
        "b2b": _prep_convbn(ks[2], mid3, out3, 3, pad=1),
        "b3b": _prep_convbn(ks[4], mid5, out5, 5, pad=2),
        "b4": _prep_convbn(ks[5], in_dim, pool, 1),
    }


def make_googlenet_params(key, num_classes=2):
    ks = jax.random.split(key, 16)
    params = {
        # layer_1
        "l1_c1": _prep_convbn(ks[0], 1, 64, 7, stride=2, pad=3),
        "l1_c2": _prep_convbn(ks[1], 64, 64, 1),
        "l1_c3": _prep_convbn(ks[2], 64, 192, 3, pad=1),
        # layer_2
        "l2_i1": _prep_inception(ks[3], 192, 64, 96, 128, 16, 32, 32),
        "l2_i2": _prep_inception(ks[4], 256, 128, 128, 192, 32, 96, 64),
        # layer_3
        "l3_i1": _prep_inception(ks[5], 480, 192, 96, 208, 16, 48, 64),
        "l3_i2": _prep_inception(ks[6], 512, 160, 112, 224, 24, 64, 64),
        "l3_i3": _prep_inception(ks[7], 512, 128, 128, 256, 24, 64, 64),
        "l3_i4": _prep_inception(ks[8], 512, 112, 144, 288, 32, 64, 64),
        "l3_i5": _prep_inception(ks[9], 528, 256, 160, 320, 32, 128, 128),
        # layer_4
        "l4_i1": _prep_inception(ks[10], 832, 256, 160, 320, 32, 128, 128),
        "l4_i2": _prep_inception(ks[11], 832, 384, 192, 384, 48, 128, 128),
    }
    # layer_4 final conv: Conv2d(1024, 1024, 3, padding=1) WITH (zero) bias + ReLU.
    w4 = jax.random.normal(ks[12], (3, 3, 1024, 1024), jnp.float32) / jnp.sqrt(
        jnp.float32(3 * 3 * 1024))
    b4 = jnp.zeros((1024,), jnp.float32)
    params["l4_conv"] = _pack_matmul(w4.reshape(9 * 1024, 1024), b4,
                                     3, 3, 1, 1, 1024, 1024)
    # fc (tiny; runs in plain XLA)
    params["fc_w"] = jax.random.normal(ks[13], (1024, num_classes),
                                       jnp.float32) / jnp.sqrt(
                                           jnp.float32(1024))
    params["fc_b"] = jnp.zeros((num_classes,), jnp.float32)
    return params


# ----------------------------------------------------------------------------
# Full forward pass
# ----------------------------------------------------------------------------

def googlenet_forward(params, x_nchw):
    # NCHW (PyTorch convention) -> NHWC; cast to bf16 ONCE, activations stay
    # bf16 through every layer (halves activation HBM bytes).
    # TODO(synk): keep channel counts padded to 128 multiples end-to-end to
    # also remove the per-layer K-pad of the patch matrix.
    x = jnp.transpose(x_nchw, (0, 2, 3, 1)).astype(jnp.bfloat16)

    # layer_1
    x = conv_fwd(params["l1_c1"], x)
    x = maxpool3x3(x, stride=2)
    x = conv_fwd(params["l1_c2"], x)
    x = conv_fwd(params["l1_c3"], x)
    x = maxpool3x3(x, stride=2)

    # layer_2
    x = inception_fwd(params["l2_i1"], x)
    x = inception_fwd(params["l2_i2"], x)
    x = maxpool3x3(x, stride=2)

    # layer_3
    x = inception_fwd(params["l3_i1"], x)
    x = inception_fwd(params["l3_i2"], x)
    x = inception_fwd(params["l3_i3"], x)
    x = inception_fwd(params["l3_i4"], x)
    x = inception_fwd(params["l3_i5"], x)
    x = maxpool3x3(x, stride=2)

    # layer_4
    x = inception_fwd(params["l4_i1"], x)
    x = inception_fwd(params["l4_i2"], x)
    x = conv_fwd(params["l4_conv"], x, relu=True)

    # AdaptiveAvgPool2d(1) + flatten + Linear(1024, num_classes).
    # Degenerate shapes -> plain XLA (per perf review; Pallas is pure overhead).
    feat = jnp.mean(x.astype(jnp.float32), axis=(1, 2))    # (N, 1024)
    logits = feat @ params["fc_w"] + params["fc_b"]        # (N, num_classes)
    return logits


# ----------------------------------------------------------------------------
# Main
# ----------------------------------------------------------------------------

if __name__ == "__main__":
    key = jax.random.PRNGKey(0)
    pkey, xkey = jax.random.split(key)
    params = make_googlenet_params(pkey, num_classes=2)

    # Small input consistent with the module: NCHW, 1 input channel, 32x32.
    x = jax.random.normal(xkey, (2, 1, 32, 32), jnp.float32)

    # Close over params so static layer metadata (kh/kw/stride/pad, splits)
    # stays Python and the pre-packed bf16 weights become jit constants.
    fwd = jax.jit(lambda inp: googlenet_forward(params, inp))
    out = fwd(x)
    jax.block_until_ready(out)

    assert out.shape == (2, 2), out.shape
    assert jnp.all(jnp.isfinite(out))
    print("KERNEL_OK")
</pallas_src>

<mosaic_0001>
module attributes {stable_mosaic.version = 11 : i64} {
  func.func @_matmul_bias_kernel(%arg0: i32, %arg1: i32, %arg2: memref<256x128xbf16, #tpu.memory_space<vmem>>, %arg3: memref<128x128xbf16, #tpu.memory_space<vmem>>, %arg4: memref<1x128xf32, #tpu.memory_space<vmem>>, %arg5: memref<256x128xbf16, #tpu.memory_space<vmem>>) attributes {dimension_semantics = [#tpu.dimension_semantics<parallel>, #tpu.dimension_semantics<parallel>], iteration_bounds = array<i64: 2, 1>, scalar_prefetch = 0 : i64, scratch_operands = 0 : i64, tpu.core_type = #tpu.core_type<tc>, window_params = [{transform_indices = @transform_0, window_bounds = array<i64: 256, 128>}, {transform_indices = @transform_1, window_bounds = array<i64: 128, 128>}, {transform_indices = @transform_2, window_bounds = array<i64: 1, 128>}, {transform_indices = @transform_3, window_bounds = array<i64: 256, 128>}]} {
    %c0 = arith.constant 0 : index
    %c0_0 = arith.constant 0 : index
    %0 = vector.load %arg2[%c0, %c0_0] : memref<256x128xbf16, #tpu.memory_space<vmem>>, vector<256x128xbf16>
    %c0_1 = arith.constant 0 : index
    %c0_2 = arith.constant 0 : index
    %1 = vector.load %arg3[%c0_1, %c0_2] : memref<128x128xbf16, #tpu.memory_space<vmem>>, vector<128x128xbf16>
    %cst = arith.constant dense<0.000000e+00> : vector<256x128xf32>
    %2 = tpu.matmul %0, %1, %cst {dimension_numbers = #tpu.dot_dimension_numbers<[1], [0], [0], [1], [0, 0, 1, 1], [], []>} : vector<256x128xbf16>, vector<128x128xbf16>, vector<256x128xf32> -> vector<256x128xf32>
    %c0_3 = arith.constant 0 : index
    %c0_4 = arith.constant 0 : index
    %3 = vector.load %arg4[%c0_3, %c0_4] : memref<1x128xf32, #tpu.memory_space<vmem>>, vector<1x128xf32>
    %4 = vector.broadcast %3 : vector<1x128xf32> to vector<256x128xf32>
    %5 = arith.addf %2, %4 : vector<256x128xf32>
    %cst_5 = arith.constant 0.000000e+00 : f32
    %6 = vector.broadcast %cst_5 : f32 to vector<256x128xf32>
    %7 = arith.maximumf %5, %6 : vector<256x128xf32>
    %8 = arith.truncf %7 : vector<256x128xf32> to vector<256x128xbf16>
    %c0_6 = arith.constant 0 : index
    %c0_7 = arith.constant 0 : index
    %9 = vector.load %arg5[%c0_6, %c0_7] : memref<256x128xbf16, #tpu.memory_space<vmem>>, vector<256x128xbf16>
    tpu.vector_store %arg5[%c0_6, %c0_7], %8 {strides = array<i32>} : memref<256x128xbf16, #tpu.memory_space<vmem>>, vector<256x128xbf16>,
    return
  }
  func.func @transform_0(%arg0: i32, %arg1: i32) -> (i32, i32) {
    %c0_i32 = arith.constant 0 : i32
    %c0_i32_0 = arith.constant 0 : i32
    return %arg0, %c0_i32 : i32, i32
  }
  func.func @transform_1(%arg0: i32, %arg1: i32) -> (i32, i32) {
    %c0_i32 = arith.constant 0 : i32
    %c0_i32_0 = arith.constant 0 : i32
    return %c0_i32, %arg1 : i32, i32
  }
  func.func @transform_2(%arg0: i32, %arg1: i32) -> (i32, i32) {
    %c0_i32 = arith.constant 0 : i32
    %c0_i32_0 = arith.constant 0 : i32
    return %c0_i32, %arg1 : i32, i32
  }
  func.func @transform_3(%arg0: i32, %arg1: i32) -> (i32, i32) {
    %c0_i32 = arith.constant 0 : i32
    return %arg0, %arg1 : i32, i32
  }
}

module attributes {stable_mosaic.version = 11 : i64} {
  func.func @_matmul_bias_kernel(%arg0: i32, %arg1: i32, %arg2: memref<64x128xbf16, #tpu.memory_space<vmem>>, %arg3: memref<128x128xbf16, #tpu.memory_space<vmem>>, %arg4: memref<1x128xf32, #tpu.memory_space<vmem>>, %arg5: memref<64x128xbf16, #tpu.memory_space<vmem>>) attributes {dimension_semantics = [#tpu.dimension_semantics<parallel>, #tpu.dimension_semantics<parallel>], iteration_bounds = array<i64: 2, 1>, scalar_prefetch = 0 : i64, scratch_operands = 0 : i64, tpu.core_type = #tpu.core_type<tc>, window_params = [{transform_indices = @transform_0, window_bounds = array<i64: 64, 128>}, {transform_indices = @transform_1, window_bounds = array<i64: 128, 128>}, {transform_indices = @transform_2, window_bounds = array<i64: 1, 128>}, {transform_indices = @transform_3, window_bounds = array<i64: 64, 128>}]} {
    %c0 = arith.constant 0 : index
    %c0_0 = arith.constant 0 : index
    %0 = vector.load %arg2[%c0, %c0_0] : memref<64x128xbf16, #tpu.memory_space<vmem>>, vector<64x128xbf16>
    %c0_1 = arith.constant 0 : index
    %c0_2 = arith.constant 0 : index
    %1 = vector.load %arg3[%c0_1, %c0_2] : memref<128x128xbf16, #tpu.memory_space<vmem>>, vector<128x128xbf16>
    %cst = arith.constant dense<0.000000e+00> : vector<64x128xf32>
    %2 = tpu.matmul %0, %1, %cst {dimension_numbers = #tpu.dot_dimension_numbers<[1], [0], [0], [1], [0, 0, 1, 1], [], []>} : vector<64x128xbf16>, vector<128x128xbf16>, vector<64x128xf32> -> vector<64x128xf32>
    %c0_3 = arith.constant 0 : index
    %c0_4 = arith.constant 0 : index
    %3 = vector.load %arg4[%c0_3, %c0_4] : memref<1x128xf32, #tpu.memory_space<vmem>>, vector<1x128xf32>
    %4 = vector.broadcast %3 : vector<1x128xf32> to vector<64x128xf32>
    %5 = arith.addf %2, %4 : vector<64x128xf32>
    %cst_5 = arith.constant 0.000000e+00 : f32
    %6 = vector.broadcast %cst_5 : f32 to vector<64x128xf32>
    %7 = arith.maximumf %5, %6 : vector<64x128xf32>
    %8 = arith.truncf %7 : vector<64x128xf32> to vector<64x128xbf16>
    %c0_6 = arith.constant 0 : index
    %c0_7 = arith.constant 0 : index
    %9 = vector.load %arg5[%c0_6, %c0_7] : memref<64x128xbf16, #tpu.memory_space<vmem>>, vector<64x128xbf16>
    tpu.vector_store %arg5[%c0_6, %c0_7], %8 {strides = array<i32>} : memref<64x128xbf16, #tpu.memory_space<vmem>>, vector<64x128xbf16>,
    return
  }
  func.func @transform_0(%arg0: i32, %arg1: i32) -> (i32, i32) {
    %c0_i32 = arith.constant 0 : i32
    %c0_i32_0 = arith.constant 0 : i32
    return %arg0, %c0_i32 : i32, i32
  }
  func.func @transform_1(%arg0: i32, %arg1: i32) -> (i32, i32) {
    %c0_i32 = arith.constant 0 : i32
    %c0_i32_0 = arith.constant 0 : i32
    return %c0_i32, %arg1 : i32, i32
  }
  func.func @transform_2(%arg0: i32, %arg1: i32) -> (i32, i32) {
    %c0_i32 = arith.constant 0 : i32
    %c0_i32_0 = arith.constant 0 : i32
    return %c0_i32, %arg1 : i32, i32
  }
  func.func @transform_3(%arg0: i32, %arg1: i32) -> (i32, i32) {
    %c0_i32 = arith.constant 0 : i32
    return %arg0, %arg1 : i32, i32
  }
}

module attributes {stable_mosaic.version = 11 : i64} {
  func.func @_matmul_bias_kernel(%arg0: i32, %arg1: i32, %arg2: memref<128x640xbf16, #tpu.memory_space<vmem>>, %arg3: memref<640x128xbf16, #tpu.memory_space<vmem>>, %arg4: memref<1x128xf32, #tpu.memory_space<vmem>>, %arg5: memref<128x128xbf16, #tpu.memory_space<vmem>>) attributes {dimension_semantics = [#tpu.dimension_semantics<parallel>, #tpu.dimension_semantics<parallel>], iteration_bounds = array<i64: 1, 2>, scalar_prefetch = 0 : i64, scratch_operands = 0 : i64, tpu.core_type = #tpu.core_type<tc>, window_params = [{transform_indices = @transform_0, window_bounds = array<i64: 128, 640>}, {transform_indices = @transform_1, window_bounds = array<i64: 640, 128>}, {transform_indices = @transform_2, window_bounds = array<i64: 1, 128>}, {transform_indices = @transform_3, window_bounds = array<i64: 128, 128>}]} {
    %c0 = arith.constant 0 : index
    %c0_0 = arith.constant 0 : index
    %0 = vector.load %arg2[%c0, %c0_0] : memref<128x640xbf16, #tpu.memory_space<vmem>>, vector<128x640xbf16>
    %c0_1 = arith.constant 0 : index
    %c0_2 = arith.constant 0 : index
    %1 = vector.load %arg3[%c0_1, %c0_2] : memref<640x128xbf16, #tpu.memory_space<vmem>>, vector<640x128xbf16>
    %cst = arith.constant dense<0.000000e+00> : vector<128x128xf32>
    %2 = tpu.matmul %0, %1, %cst {dimension_numbers = #tpu.dot_dimension_numbers<[1], [0], [0], [1], [0, 0, 1, 1], [], []>} : vector<128x640xbf16>, vector<640x128xbf16>, vector<128x128xf32> -> vector<128x128xf32>
    %c0_3 = arith.constant 0 : index
    %c0_4 = arith.constant 0 : index
    %3 = vector.load %arg4[%c0_3, %c0_4] : memref<1x128xf32, #tpu.memory_space<vmem>>, vector<1x128xf32>
    %4 = vector.broadcast %3 : vector<1x128xf32> to vector<128x128xf32>
    %5 = arith.addf %2, %4 : vector<128x128xf32>
    %cst_5 = arith.constant 0.000000e+00 : f32
    %6 = vector.broadcast %cst_5 : f32 to vector<128x128xf32>
    %7 = arith.maximumf %5, %6 : vector<128x128xf32>
    %8 = arith.truncf %7 : vector<128x128xf32> to vector<128x128xbf16>
    %c0_6 = arith.constant 0 : index
    %c0_7 = arith.constant 0 : index
    %9 = vector.load %arg5[%c0_6, %c0_7] : memref<128x128xbf16, #tpu.memory_space<vmem>>, vector<128x128xbf16>
    tpu.vector_store %arg5[%c0_6, %c0_7], %8 {strides = array<i32>} : memref<128x128xbf16, #tpu.memory_space<vmem>>, vector<128x128xbf16>,
    return
  }
  func.func @transform_0(%arg0: i32, %arg1: i32) -> (i32, i32) {
    %c0_i32 = arith.constant 0 : i32
    %c0_i32_0 = arith.constant 0 : i32
    return %arg0, %c0_i32 : i32, i32
  }
  func.func @transform_1(%arg0: i32, %arg1: i32) -> (i32, i32) {
    %c0_i32 = arith.constant 0 : i32
    %c0_i32_0 = arith.constant 0 : i32
    return %c0_i32, %arg1 : i32, i32
  }
  func.func @transform_2(%arg0: i32, %arg1: i32) -> (i32, i32) {
    %c0_i32 = arith.constant 0 : i32
    %c0_i32_0 = arith.constant 0 : i32
    return %c0_i32, %arg1 : i32, i32
  }
  func.func @transform_3(%arg0: i32, %arg1: i32) -> (i32, i32) {
    %c0_i32 = arith.constant 0 : i32
    return %arg0, %arg1 : i32, i32
  }
}

</mosaic_0001>

<llo_original>
// kernel: _lambda_.3
$region0: #{_lambda_.3}
  #allocation0 [shape = 'u32[]', space=smem, size = 0x4, offset = 0x4, fixed_abs, tag = 'smem constant byte address 0x4 - core index']
  #allocation1 [shape = 'u32[144,128]{1,0:T(1,128)}', space=vmem, size = 0x12000, scoped, tag = 'internal scratch']
  %s0 = inlined_call_operand.vmem [shape: bf16[512,128], index: 0, kind: input, shape index: {}]
  %s1 = inlined_call_operand.hbm [shape: bf16[128,128], index: 1, kind: input, shape index: {}]
  %s2 = inlined_call_operand.vmem [shape: f32[1,128], index: 2, kind: input, shape index: {}]
  %s3 = inlined_call_operand.vmem [shape: bf16[512,128], index: 3, kind: output, shape index: {}]
  %s4 = sld [smem:[#allocation0]]
  $region49: #{_lambda_.3} parent=0
    _
  %s6 = ssub.s32 1, %s4
  %s7 = scalar_select 0, %s6, %s4
  $region1: #{_lambda_.3} parent=0
    #allocation2 [shape = 'u8[32768]{0}', space=vmem, size = 0x8000, scoped, tag = 'input window, operand 1, single buffered']
    #allocation3 [shape = 's32[2]{0}', space=sflag, size = 0x8, scoped, tag = 'scoped memory for _lambda_.3']
    %8 = vsyncpa [#allocation3], 0
    loop: start=0, step=1, limit=4
    $region2: #{_lambda_.3} parent=1 // loop_pre_header
      _
    $region3: #{_lambda_.3} parent=1 // loop_header
      %s10 = sphi 0, %s14
      %p11 = scmp.ge.s32.totalorder %s10, 4
      %s17 = sphi 0, %s29
      %s18 = sphi 0, %s25
      %s19 = sphi 0, %s17
      %s20 = sphi 0, %s18
      %s21 = sphi 0, %s19
      %s22 = sphi 0, %s20
      %s32 = sphi 0, %s34
      %s35 = sphi 0, %s32
      %s36 = sphi 0, %s35
      %s52 = sphi 0, %s36
      %s58 = sphi 0, %s60
      %s61 = sphi 0, %s58
      %s62 = sphi 0, %s61
      %s78 = sphi 0, %s62
      %s84 = sphi 0, %s86
      %s87 = sphi 0, %s84
      %s88 = sphi 0, %s87
      %s104 = sphi 0, %s88
      %s112 = sphi 0, %s114
      %s115 = sphi 0, %s112
      %s116 = sphi 0, %s115
      %s132 = sphi 0, %s116
    $region4: #{_lambda_.3} parent=1 // loop_header_branch
      %13 = sbr.rel (%p11) target = $region8
    $region5: #{_lambda_.3} parent=1 // loop_body
      %s15 = ssub.s32 %s10, 1
      %s16 = ssub.s32 %s10, 2
      %s23 = sadd.s32 1, %s18
      %p24 = scmp.ge.s32.totalorder %s23, 1
      %s25 = scalar_select %p24, 0, %s23
      %s26 = sadd.s32 1, %s17
      %s27 = scalar_select %p24, %s26, %s17
      %p28 = scmp.ge.s32.totalorder %s27, 2
      %s29 = scalar_select %p28, 0, %s27
      %s30 = ssub.s32 %s17, %s29
      %p31 = scmp.eq.s32.totalorder %s30, 0
      %s33 = sadd.s32 %s32, 1
      %s34 = scalar_select %p31, %s32, %s33
      %p37 = pneg %p31
      %p38 = scmp.eq.s32.totalorder %s10, 1
      %p39 = por %p37, %p38
      %p40 = scmp.ne.s32.totalorder %s32, %s35
      %p41 = scmp.eq.s32.totalorder %s10, 0
      %p42 = por %p40, %p41
      %p43 = scmp.ne.s32.totalorder %s32, %s35
      %p44 = scmp.eq.s32.totalorder %s15, 1
      %p45 = por %p43, %p44
      %p46 = scmp.ne.s32.totalorder %s35, %s36
      %p47 = scmp.eq.s32.totalorder %s15, 0
      %p48 = por %p46, %p47
      %p49 = scmp.ne.s32.totalorder %s35, %s36
      %p50 = scmp.eq.s32.totalorder %s16, 1
      %p51 = por %p49, %p50
      %p53 = scmp.ne.s32.totalorder %s36, %s52
      %p54 = scmp.eq.s32.totalorder %s16, 0
      %p55 = por %p53, %p54
      %s56 = ssub.s32 %s18, %s25
      %p57 = scmp.eq.s32.totalorder %s56, 0
      %s59 = sadd.s32 %s58, 1
      %s60 = scalar_select %p57, %s58, %s59
      %p63 = pneg %p57
      %p64 = scmp.eq.s32.totalorder %s10, 1
      %p65 = por %p63, %p64
      %p66 = scmp.ne.s32.totalorder %s58, %s61
      %p67 = scmp.eq.s32.totalorder %s10, 0
      %p68 = por %p66, %p67
      %p69 = scmp.ne.s32.totalorder %s58, %s61
      %p70 = scmp.eq.s32.totalorder %s15, 1
      %p71 = por %p69, %p70
      %p72 = scmp.ne.s32.totalorder %s61, %s62
      %p73 = scmp.eq.s32.totalorder %s15, 0
      %p74 = por %p72, %p73
      %p75 = scmp.ne.s32.totalorder %s61, %s62
      %p76 = scmp.eq.s32.totalorder %s16, 1
      %p77 = por %p75, %p76
      %p79 = scmp.ne.s32.totalorder %s62, %s78
      %p80 = scmp.eq.s32.totalorder %s16, 0
      %p81 = por %p79, %p80
      %s82 = ssub.s32 %s18, %s25
      %p83 = scmp.eq.s32.totalorder %s82, 0
      %s85 = sadd.s32 %s84, 1
      %s86 = scalar_select %p83, %s84, %s85
      %p89 = pneg %p83
      %p90 = scmp.eq.s32.totalorder %s10, 1
      %p91 = por %p89, %p90
      %p92 = scmp.ne.s32.totalorder %s84, %s87
      %p93 = scmp.eq.s32.totalorder %s10, 0
      %p94 = por %p92, %p93
      %p95 = scmp.ne.s32.totalorder %s84, %s87
      %p96 = scmp.eq.s32.totalorder %s15, 1
      %p97 = por %p95, %p96
      %p98 = scmp.ne.s32.totalorder %s87, %s88
      %p99 = scmp.eq.s32.totalorder %s15, 0
      %p100 = por %p98, %p99
      %p101 = scmp.ne.s32.totalorder %s87, %s88
      %p102 = scmp.eq.s32.totalorder %s16, 1
      %p103 = por %p101, %p102
      %p105 = scmp.ne.s32.totalorder %s88, %s104
      %p106 = scmp.eq.s32.totalorder %s16, 0
      %p107 = por %p105, %p106
      %s108 = ssub.s32 %s17, %s29
      %s109 = ssub.s32 %s18, %s25
      %s110 = sor.u32 %s108, %s109
      %p111 = scmp.eq.s32.totalorder %s110, 0
      %s113 = sadd.s32 %s112, 1
      %s114 = scalar_select %p111, %s112, %s113
      %p117 = pneg %p111
      %p118 = scmp.eq.s32.totalorder %s10, 1
      %p119 = por %p117, %p118
      %p120 = scmp.ne.s32.totalorder %s112, %s115
      %p121 = scmp.eq.s32.totalorder %s10, 0
      %p122 = por %p120, %p121
      %p123 = scmp.ne.s32.totalorder %s112, %s115
      %p124 = scmp.eq.s32.totalorder %s15, 1
      %p125 = por %p123, %p124
      %p126 = scmp.ne.s32.totalorder %s115, %s116
      %p127 = scmp.eq.s32.totalorder %s15, 0
      %p128 = por %p126, %p127
      %p129 = scmp.ne.s32.totalorder %s115, %s116
      %p130 = scmp.eq.s32.totalorder %s16, 1
      %p131 = por %p129, %p130
      %p133 = scmp.ne.s32.totalorder %s116, %s132
      %p134 = scmp.eq.s32.totalorder %s16, 0
      %p135 = por %p133, %p134
      %p136 = scmp.le.s32.totalorder 1, %s10
      %p137 = scmp.lt.s32.totalorder %s10, 3
      %p138 = pnand %p136, %p137
      %p139 = pneg %p138
      // Predicated region
      $region9: #{_lambda_.3} parent=5 // pred_check
        _
      $region10: #{_lambda_.3} parent=5 // pred_check_branch
        %141 = sbr.rel (%p138) target = $region12
      $region11: #{_lambda_.3} parent=5 // pred_region
        %s142 = ssub.s32 %s10, 1
        // Predicated region
        $region13: #{_lambda_.3} parent=11 // pred_check
          %p143 = pneg %p74
        $region14: #{_lambda_.3} parent=11 // pred_check_branch
          %145 = sbr.rel (%p143) target = $region16
        $region15: #{_lambda_.3} parent=11 // pred_region
          %s147 = ssub.s32 1024, 1024
          %148 = vsyncadd [#allocation3], %s147
          %s149 = smul.addr %s20, 64
          %s150 = scalar_lea.hbm %s1, %s149
          %s151 = sshll.u32 [#allocation2], 4
          %s152 = int_to_ptr.vmem [resolvable:$true] %s151
          %157 = dma.hbm_to_vmem [thread:$0]  %s150, 1024, %s152, [#allocation3], 64, 64, 4
        $region16: #{_lambda_.3} parent=11 // pred_fallthru
          _
        // Predicated region
        $region17: #{_lambda_.3} parent=11 // pred_check
          %p158 = pneg %p100
        $region18: #{_lambda_.3} parent=11 // pred_check_branch
          %160 = sbr.rel (%p158) target = $region20
        $region19: #{_lambda_.3} parent=11 // pred_region
          %p161 = scmp.lt.s32.totalorder %s20, 0
          %s162 = scalar_select %p161, %s20, 0
          %s163 = scalar_lea.vmem %s2, %s162
        $region20: #{_lambda_.3} parent=11 // pred_fallthru
          _
      $region12: #{_lambda_.3} parent=5 // pred_fallthru
        _
      %p164 = scmp.lt.s32.totalorder %s10, 2
      // Predicated region
      $region21: #{_lambda_.3} parent=5 // pred_check
        %p165 = pneg %p164
      $region22: #{_lambda_.3} parent=5 // pred_check_branch
        %167 = sbr.rel (%p165) target = $region24
      $region23: #{_lambda_.3} parent=5 // pred_region
        // Predicated region
        $region25: #{_lambda_.3} parent=23 // pred_check
          %p168 = pneg %p42
        $region26: #{_lambda_.3} parent=23 // pred_check_branch
          %170 = sbr.rel (%p168) target = $region28
        $region27: #{_lambda_.3} parent=23 // pred_region
          %s171 = smul.u32 32, %s17
          %p172 = scmp.lt.s32.totalorder %s171, 63
          %s173 = scalar_select %p172, %s171, 63
          %s174 = smul.addr %s173, 4
          %s175 = scalar_lea.vmem %s0, %s174
          %s176 = smul.u32 32, %s17
        $region28: #{_lambda_.3} parent=23 // pred_fallthru
          _
      $region24: #{_lambda_.3} parent=5 // pred_fallthru
        _
      %p177 = scmp.le.s32.totalorder 1, %s10
      %p178 = scmp.lt.s32.totalorder %s10, 3
      %p179 = pnand %p177, %p178
      %p180 = pneg %p179
      // Predicated region
      $region29: #{_lambda_.3} parent=5 // pred_check
        _
      $region30: #{_lambda_.3} parent=5 // pred_check_branch
        %182 = sbr.rel (%p179) target = $region32
      $region31: #{_lambda_.3} parent=5 // pred_region
        %s183 = ssub.s32 %s10, 1
        // Predicated region
        $region33: #{_lambda_.3} parent=31 // pred_check
          %p184 = pneg %p74
        $region34: #{_lambda_.3} parent=31 // pred_check_branch
          %186 = sbr.rel (%p184) target = $region36
        $region35: #{_lambda_.3} parent=31 // pred_region
          %187 = dma.done [#allocation3], 1024
        $region36: #{_lambda_.3} parent=31 // pred_fallthru
          _
        %s188 = smul.u32 32, %s19
        %p189 = scmp.lt.s32.totalorder %s188, 63
        %s190 = scalar_select %p189, %s188, 63
        %s191 = smul.addr %s190, 4
        %s192 = scalar_lea.vmem %s0, %s191
        %p193 = pneg %p48
        %p194 = pneg %p45
        %p195 = pneg %p74
        %p196 = pneg %p71
        %p197 = scmp.lt.s32.totalorder %s20, 0
        %s198 = scalar_select %p197, %s20, 0
        %s199 = scalar_lea.vmem %s2, %s198
        %p200 = pneg %p100
        %p201 = pneg %p97
        %p202 = pneg %p128
        %p203 = pneg %p125
        %s204 = smul.u32 32, %s19
        %p205 = scmp.lt.s32.totalorder %s204, 63
        %s206 = scalar_select %p205, %s204, 63
        %p207 = scmp.lt.s32.totalorder %s20, 0
        %s208 = scalar_select %p207, %s20, 0
        %s209 = sadd.s32 %s208, %s206
        %s210 = smul.addr %s209, 4
        %s211 = scalar_lea.vmem %s3, %s210
        %s212 = smul.u32 32, %s19
        %p213 = scmp.lt.s32.totalorder %s212, 63
        %s214 = scalar_select %p213, %s212, 63
        %s215 = smul.addr %s214, 4
        %s216 = scalar_lea.vmem %s0, %s215
        %s217 = smul.u32 32, %s19
        %p218 = scmp.lt.s32.totalorder %s20, 0
        %s219 = scalar_select %p218, %s20, 0
        %s220 = scalar_lea.vmem %s2, %s219
        %s221 = smul.u32 32, %s19
        %p222 = scmp.lt.s32.totalorder %s221, 63
        %s223 = scalar_select %p222, %s221, 63
        %p224 = scmp.lt.s32.totalorder %s20, 0
        %s225 = scalar_select %p224, %s20, 0
        %s226 = sadd.s32 %s225, %s223
        %s227 = smul.addr %s226, 4
        %s228 = scalar_lea.vmem %s3, %s227
        %s229 = smul.u32 32, %s19
        %v231 = vld [vmem:[%s216] sm:$0xf]
        %v232 = vld [vmem:[%s216 + $0x4] sm:$0xf]
        %v233 = vld [vmem:[%s216 + $0x8] sm:$0xf]
        %v234 = vld [vmem:[%s216 + $0xc] sm:$0xf]
        %v235 = vld [vmem:[%s216 + $0x10] sm:$0xf]
        %v236 = vld [vmem:[%s216 + $0x14] sm:$0xf]
        %v237 = vld [vmem:[%s216 + $0x18] sm:$0xf]
        %v238 = vld [vmem:[%s216 + $0x1c] sm:$0xf]
        %v239 = vld [vmem:[%s216 + $0x20] sm:$0xf]
        %v240 = vld [vmem:[%s216 + $0x24] sm:$0xf]
        %v241 = vld [vmem:[%s216 + $0x28] sm:$0xf]
        %v242 = vld [vmem:[%s216 + $0x2c] sm:$0xf]
        %v243 = vld [vmem:[%s216 + $0x30] sm:$0xf]
        %v244 = vld [vmem:[%s216 + $0x34] sm:$0xf]
        %v245 = vld [vmem:[%s216 + $0x38] sm:$0xf]
        %v246 = vld [vmem:[%s216 + $0x3c] sm:$0xf]
        %v247 = vld [vmem:[%s216 + $0x40] sm:$0xf]
        %v248 = vld [vmem:[%s216 + $0x44] sm:$0xf]
        %v249 = vld [vmem:[%s216 + $0x48] sm:$0xf]
        %v250 = vld [vmem:[%s216 + $0x4c] sm:$0xf]
        %v251 = vld [vmem:[%s216 + $0x50] sm:$0xf]
        %v252 = vld [vmem:[%s216 + $0x54] sm:$0xf]
        %v253 = vld [vmem:[%s216 + $0x58] sm:$0xf]
        %v254 = vld [vmem:[%s216 + $0x5c] sm:$0xf]
        %v255 = vld [vmem:[%s216 + $0x60] sm:$0xf]
        %v256 = vld [vmem:[%s216 + $0x64] sm:$0xf]
        %v257 = vld [vmem:[%s216 + $0x68] sm:$0xf]
        %v258 = vld [vmem:[%s216 + $0x6c] sm:$0xf]
        %v259 = vld [vmem:[%s216 + $0x70] sm:$0xf]
        %v260 = vld [vmem:[%s216 + $0x74] sm:$0xf]
        %v261 = vld [vmem:[%s216 + $0x78] sm:$0xf]
        %v262 = vld [vmem:[%s216 + $0x7c] sm:$0xf]
        %v263 = vld [vmem:[#allocation2] sm:$0xf]
        %v264 = vld [vmem:[#allocation2 + $0x4] sm:$0xf]
        %v265 = vld [vmem:[#allocation2 + $0x8] sm:$0xf]
        %v266 = vld [vmem:[#allocation2 + $0xc] sm:$0xf]
        %v267 = vld [vmem:[#allocation2 + $0x10] sm:$0xf]
        %v268 = vld [vmem:[#allocation2 + $0x14] sm:$0xf]
        %v269 = vld [vmem:[#allocation2 + $0x18] sm:$0xf]
        %v270 = vld [vmem:[#allocation2 + $0x1c] sm:$0xf]
        %v271 = vld [vmem:[#allocation2 + $0x20] sm:$0xf]
        %v272 = vld [vmem:[#allocation2 + $0x24] sm:$0xf]
        %v273 = vld [vmem:[#allocation2 + $0x28] sm:$0xf]
        %v274 = vld [vmem:[#allocation2 + $0x2c] sm:$0xf]
        %v275 = vld [vmem:[#allocation2 + $0x30] sm:$0xf]
        %v276 = vld [vmem:[#allocation2 + $0x34] sm:$0xf]
        %v277 = vld [vmem:[#allocation2 + $0x38] sm:$0xf]
        %v278 = vld [vmem:[#allocation2 + $0x3c] sm:$0xf]
        %v279 = vld [vmem:[%s220] sm:$0x1]
        %v281 = vlaneseq
        %v282 = vshrl.u32 %v281, 7
        %v283 = vsub.s32 0, %v282
        %v284 = vrot.slane %v279, %v283
        %v318 = vunpack.c.l.b16 %v231
        %v319 = vunpack.c.l.b16 %v232
        %v320 = vunpack.c.l.b16 %v233
        %v321 = vunpack.c.l.b16 %v234
        %v322 = vunpack.c.l.b16 %v235
        %v323 = vunpack.c.l.b16 %v236
        %v324 = vunpack.c.l.b16 %v237
        %v325 = vunpack.c.l.b16 %v238
        %v326 = vunpack.c.l.b16 %v239
        %v327 = vunpack.c.l.b16 %v240
        %v328 = vunpack.c.l.b16 %v241
        %v329 = vunpack.c.l.b16 %v242
        %v330 = vunpack.c.l.b16 %v243
        %v331 = vunpack.c.l.b16 %v244
        %v332 = vunpack.c.l.b16 %v245
        %v333 = vunpack.c.l.b16 %v246
        %v334 = vunpack.c.l.b16 %v247
        %v335 = vunpack.c.l.b16 %v248
        %v336 = vunpack.c.l.b16 %v249
        %v337 = vunpack.c.l.b16 %v250
        %v338 = vunpack.c.l.b16 %v251
        %v339 = vunpack.c.l.b16 %v252
        %v340 = vunpack.c.l.b16 %v253
        %v341 = vunpack.c.l.b16 %v254
        %v342 = vunpack.c.l.b16 %v255
        %v343 = vunpack.c.l.b16 %v256
        %v344 = vunpack.c.l.b16 %v257
        %v345 = vunpack.c.l.b16 %v258
        %v346 = vunpack.c.l.b16 %v259
        %v347 = vunpack.c.l.b16 %v260
        %v348 = vunpack.c.l.b16 %v261
        %v349 = vunpack.c.l.b16 %v262
        %v350 = vpack.c.b16 %v319, %v318
        %v351 = vpack.c.b16 %v321, %v320
        %v352 = vpack.c.b16 %v323, %v322
        %v353 = vpack.c.b16 %v325, %v324
        %v354 = vpack.c.b16 %v327, %v326
        %v355 = vpack.c.b16 %v329, %v328
        %v356 = vpack.c.b16 %v331, %v330
        %v357 = vpack.c.b16 %v333, %v332
        %v358 = vpack.c.b16 %v335, %v334
        %v359 = vpack.c.b16 %v337, %v336
        %v360 = vpack.c.b16 %v339, %v338
        %v361 = vpack.c.b16 %v341, %v340
        %v362 = vpack.c.b16 %v343, %v342
        %v363 = vpack.c.b16 %v345, %v344
        %v364 = vpack.c.b16 %v347, %v346
        %v365 = vpack.c.b16 %v349, %v348
        %v398 = vunpack.c.l.b16 %v263
        %v399 = vunpack.c.l.b16 %v264
        %v400 = vunpack.c.l.b16 %v265
        %v401 = vunpack.c.l.b16 %v266
        %v402 = vunpack.c.l.b16 %v267
        %v403 = vunpack.c.l.b16 %v268
        %v404 = vunpack.c.l.b16 %v269
        %v405 = vunpack.c.l.b16 %v270
        %v406 = vunpack.c.l.b16 %v271
        %v407 = vunpack.c.l.b16 %v272
        %v408 = vunpack.c.l.b16 %v273
        %v409 = vunpack.c.l.b16 %v274
        %v410 = vunpack.c.l.b16 %v275
        %v411 = vunpack.c.l.b16 %v276
        %v412 = vunpack.c.l.b16 %v277
        %v413 = vunpack.c.l.b16 %v278
        %v414 = vpack.c.b16 %v399, %v398
        %v415 = vpack.c.b16 %v401, %v400
        %v416 = vpack.c.b16 %v403, %v402
        %v417 = vpack.c.b16 %v405, %v404
        %v418 = vpack.c.b16 %v407, %v406
        %v419 = vpack.c.b16 %v409, %v408
        %v420 = vpack.c.b16 %v411, %v410
        %v421 = vpack.c.b16 %v413, %v412
        %430 = vmatprep.subr.bf16.mxu0 0
        %431 = vmatpush1.bf16.msra.mxu0 %v414
        %432 = vmatprep.subr.bf16.mxu0 0
        %433 = vmatpush1.bf16.msra.mxu0 %v415
        %434 = vmatprep.subr.bf16.mxu0 0
        %435 = vmatpush1.bf16.msra.mxu0 %v416
        %436 = vmatprep.subr.bf16.mxu0 0
        %437 = vmatpush1.bf16.msra.mxu0 %v417
        %438 = vmatprep.subr.bf16.mxu0 0
        %439 = vmatpush1.bf16.msra.mxu0 %v418
        %440 = vmatprep.subr.bf16.mxu0 0
        %441 = vmatpush1.bf16.msra.mxu0 %v419
        %442 = vmatprep.subr.bf16.mxu0 0
        %443 = vmatpush1.bf16.msra.mxu0 %v420
        %444 = vmatprep.subr.bf16.mxu0 0
        %445 = vmatpush1.bf16.msra.mxu0 %v421
        %446 = vmatprep.subr.bf16.mxu0 0
        %447 = vmatpush1.bf16.msra.mxu0 0
        %448 = vmatprep.subr.bf16.mxu0 0
        %449 = vmatpush1.bf16.msra.mxu0 0
        %450 = vmatprep.subr.bf16.mxu0 0
        %451 = vmatpush1.bf16.msra.mxu0 0
        %452 = vmatprep.subr.bf16.mxu0 0
        %453 = vmatpush1.bf16.msra.mxu0 0
        %454 = vmatprep.subr.bf16.mxu0 0
        %455 = vmatpush1.bf16.msra.mxu0 0
        %456 = vmatprep.subr.bf16.mxu0 0
        %457 = vmatpush1.bf16.msra.mxu0 0
        %458 = vmatprep.subr.bf16.mxu0 0
        %459 = vmatpush1.bf16.msra.mxu0 0
        %460 = vmatprep.subr.bf16.mxu0 0
        %461 = vmatpush1.bf16.msra.mxu0 0
        %462 = vmatprep.mubr.bf16.mxu0 0
        %463 = vmatmul.mubr.bf16.gmra.mrb[0].mxu0 %v350
        %v464 = vpop.f32.mrb[0].mxu0
        %v465 = vadd.f32 %v284, %v464
        %v466 = vpop.f32.mrb[0].mxu0
        %v467 = vpop.f32.mrb[0].mxu0
        %v468 = vadd.f32 %v284, %v467
        %v469 = vpop.f32.mrb[0].mxu0
        %470 = vmatprep.mubr.bf16.mxu0 0
        %471 = vmatmul.mubr.bf16.gmra.mrb[0].mxu0 %v351
        %v472 = vpop.f32.mrb[0].mxu0
        %v473 = vadd.f32 %v284, %v472
        %v474 = vpop.f32.mrb[0].mxu0
        %v475 = vpop.f32.mrb[0].mxu0
        %v476 = vadd.f32 %v284, %v475
        %v477 = vpop.f32.mrb[0].mxu0
        %478 = vmatprep.mubr.bf16.mxu0 0
        %479 = vmatmul.mubr.bf16.gmra.mrb[0].mxu0 %v352
        %v480 = vpop.f32.mrb[0].mxu0
        %v481 = vadd.f32 %v284, %v480
        %v482 = vpop.f32.mrb[0].mxu0
        %v483 = vpop.f32.mrb[0].mxu0
        %v484 = vadd.f32 %v284, %v483
        %v485 = vpop.f32.mrb[0].mxu0
        %486 = vmatprep.mubr.bf16.mxu0 0
        %487 = vmatmul.mubr.bf16.gmra.mrb[0].mxu0 %v353
        %v488 = vpop.f32.mrb[0].mxu0
        %v489 = vadd.f32 %v284, %v488
        %v490 = vpop.f32.mrb[0].mxu0
        %v491 = vpop.f32.mrb[0].mxu0
        %v492 = vadd.f32 %v284, %v491
        %v493 = vpop.f32.mrb[0].mxu0
        %494 = vmatprep.mubr.bf16.mxu0 0
        %495 = vmatmul.mubr.bf16.gmra.mrb[0].mxu0 %v354
        %v496 = vpop.f32.mrb[0].mxu0
        %v497 = vadd.f32 %v284, %v496
        %v498 = vpop.f32.mrb[0].mxu0
        %v499 = vpop.f32.mrb[0].mxu0
        %v500 = vadd.f32 %v284, %v499
        %v501 = vpop.f32.mrb[0].mxu0
        %502 = vmatprep.mubr.bf16.mxu0 0
        %503 = vmatmul.mubr.bf16.gmra.mrb[0].mxu0 %v355
        %v504 = vpop.f32.mrb[0].mxu0
        %v505 = vadd.f32 %v284, %v504
        %v506 = vpop.f32.mrb[0].mxu0
        %v507 = vpop.f32.mrb[0].mxu0
        %v508 = vadd.f32 %v284, %v507
        %v509 = vpop.f32.mrb[0].mxu0
        %510 = vmatprep.mubr.bf16.mxu0 0
        %511 = vmatmul.mubr.bf16.gmra.mrb[0].mxu0 %v356
        %v512 = vpop.f32.mrb[0].mxu0
        %v513 = vadd.f32 %v284, %v512
        %v514 = vpop.f32.mrb[0].mxu0
        %v515 = vpop.f32.mrb[0].mxu0
        %v516 = vadd.f32 %v284, %v515
        %v517 = vpop.f32.mrb[0].mxu0
        %518 = vmatprep.mubr.bf16.mxu0 0
        %519 = vmatmul.mubr.bf16.gmra.mrb[0].mxu0 %v357
        %v520 = vpop.f32.mrb[0].mxu0
        %v521 = vadd.f32 %v284, %v520
        %v522 = vpop.f32.mrb[0].mxu0
        %v523 = vpop.f32.mrb[0].mxu0
        %v524 = vadd.f32 %v284, %v523
        %v525 = vpop.f32.mrb[0].mxu0
        %526 = vmatprep.mubr.bf16.mxu0 0
        %527 = vmatmul.mubr.bf16.gmra.mrb[0].mxu0 %v358
        %v528 = vpop.f32.mrb[0].mxu0
        %v529 = vadd.f32 %v284, %v528
        %v530 = vpop.f32.mrb[0].mxu0
        %v531 = vpop.f32.mrb[0].mxu0
        %v532 = vadd.f32 %v284, %v531
        %v533 = vpop.f32.mrb[0].mxu0
        %534 = vmatprep.mubr.bf16.mxu0 0
        %535 = vmatmul.mubr.bf16.gmra.mrb[0].mxu0 %v359
        %v536 = vpop.f32.mrb[0].mxu0
        %v537 = vadd.f32 %v284, %v536
        %v538 = vpop.f32.mrb[0].mxu0
        %v539 = vpop.f32.mrb[0].mxu0
        %v540 = vadd.f32 %v284, %v539
        %v541 = vpop.f32.mrb[0].mxu0
        %542 = vmatprep.mubr.bf16.mxu0 0
        %543 = vmatmul.mubr.bf16.gmra.mrb[0].mxu0 %v360
        %v544 = vpop.f32.mrb[0].mxu0
        %v545 = vadd.f32 %v284, %v544
        %v546 = vpop.f32.mrb[0].mxu0
        %v547 = vpop.f32.mrb[0].mxu0
        %v548 = vadd.f32 %v284, %v547
        %v549 = vpop.f32.mrb[0].mxu0
        %550 = vmatprep.mubr.bf16.mxu0 0
        %551 = vmatmul.mubr.bf16.gmra.mrb[0].mxu0 %v361
        %v552 = vpop.f32.mrb[0].mxu0
        %v553 = vadd.f32 %v284, %v552
        %v554 = vpop.f32.mrb[0].mxu0
        %v555 = vpop.f32.mrb[0].mxu0
        %v556 = vadd.f32 %v284, %v555
        %v557 = vpop.f32.mrb[0].mxu0
        %558 = vmatprep.mubr.bf16.mxu0 0
        %559 = vmatmul.mubr.bf16.gmra.mrb[0].mxu0 %v362
        %v560 = vpop.f32.mrb[0].mxu0
        %v561 = vadd.f32 %v284, %v560
        %v562 = vpop.f32.mrb[0].mxu0
        %v563 = vpop.f32.mrb[0].mxu0
        %v564 = vadd.f32 %v284, %v563
        %v565 = vpop.f32.mrb[0].mxu0
        %566 = vmatprep.mubr.bf16.mxu0 0
        %567 = vmatmul.mubr.bf16.gmra.mrb[0].mxu0 %v363
        %v568 = vpop.f32.mrb[0].mxu0
        %v569 = vadd.f32 %v284, %v568
        %v570 = vpop.f32.mrb[0].mxu0
        %v571 = vpop.f32.mrb[0].mxu0
        %v572 = vadd.f32 %v284, %v571
        %v573 = vpop.f32.mrb[0].mxu0
        %574 = vmatprep.mubr.bf16.mxu0 0
        %575 = vmatmul.mubr.bf16.gmra.mrb[0].mxu0 %v364
        %v576 = vpop.f32.mrb[0].mxu0
        %v577 = vadd.f32 %v284, %v576
        %v578 = vpop.f32.mrb[0].mxu0
        %v579 = vpop.f32.mrb[0].mxu0
        %v580 = vadd.f32 %v284, %v579
        %v581 = vpop.f32.mrb[0].mxu0
        %582 = vmatprep.mubr.bf16.mxu0 0
        %583 = vmatmul.mubr.bf16.gmra.mrb[0].mxu0 %v365
        %v584 = vpop.f32.mrb[0].mxu0
        %v585 = vadd.f32 %v284, %v584
        %v586 = vpop.f32.mrb[0].mxu0
        %v587 = vpop.f32.mrb[0].mxu0
        %v588 = vadd.f32 %v284, %v587
        %v589 = vpop.f32.mrb[0].mxu0
        %590 = vdwg.mxu0
        %v591 = vmax.f32 %v465, 0.0
        %v592 = vmax.f32 %v468, 0.0
        %v593 = vmax.f32 %v473, 0.0
        %v594 = vmax.f32 %v476, 0.0
        %v595 = vmax.f32 %v481, 0.0
        %v596 = vmax.f32 %v484, 0.0
        %v597 = vmax.f32 %v489, 0.0
        %v598 = vmax.f32 %v492, 0.0
        %v599 = vmax.f32 %v497, 0.0
        %v600 = vmax.f32 %v500, 0.0
        %v601 = vmax.f32 %v505, 0.0
        %v602 = vmax.f32 %v508, 0.0
        %v603 = vmax.f32 %v513, 0.0
        %v604 = vmax.f32 %v516, 0.0
        %v605 = vmax.f32 %v521, 0.0
        %v606 = vmax.f32 %v524, 0.0
        %v607 = vmax.f32 %v529, 0.0
        %v608 = vmax.f32 %v532, 0.0
        %v609 = vmax.f32 %v537, 0.0
        %v610 = vmax.f32 %v540, 0.0
        %v611 = vmax.f32 %v545, 0.0
        %v612 = vmax.f32 %v548, 0.0
        %v613 = vmax.f32 %v553, 0.0
        %v614 = vmax.f32 %v556, 0.0
        %v615 = vmax.f32 %v561, 0.0
        %v616 = vmax.f32 %v564, 0.0
        %v617 = vmax.f32 %v569, 0.0
        %v618 = vmax.f32 %v572, 0.0
        %v619 = vmax.f32 %v577, 0.0
        %v620 = vmax.f32 %v580, 0.0
        %v621 = vmax.f32 %v585, 0.0
        %v622 = vmax.f32 %v588, 0.0
        %v623 = vpack.c.bf16 %v592, %v591
        %v624 = vpack.c.bf16 %v594, %v593
        %v625 = vpack.c.bf16 %v596, %v595
        %v626 = vpack.c.bf16 %v598, %v597
        %v627 = vpack.c.bf16 %v600, %v599
        %v628 = vpack.c.bf16 %v602, %v601
        %v629 = vpack.c.bf16 %v604, %v603
        %v630 = vpack.c.bf16 %v606, %v605
        %v631 = vpack.c.bf16 %v608, %v607
        %v632 = vpack.c.bf16 %v610, %v609
        %v633 = vpack.c.bf16 %v612, %v611
        %v634 = vpack.c.bf16 %v614, %v613
        %v635 = vpack.c.bf16 %v616, %v615
        %v636 = vpack.c.bf16 %v618, %v617
        %v637 = vpack.c.bf16 %v620, %v619
        %v638 = vpack.c.bf16 %v622, %v621
        %v655 = vunpack.c.l.b16 %v623
        %v656 = vunpack.c.h.b16 %v623
        %v657 = vunpack.c.l.b16 %v624
        %v658 = vunpack.c.h.b16 %v624
        %v659 = vunpack.c.l.b16 %v625
        %v660 = vunpack.c.h.b16 %v625
        %v661 = vunpack.c.l.b16 %v626
        %v662 = vunpack.c.h.b16 %v626
        %v663 = vunpack.c.l.b16 %v627
        %v664 = vunpack.c.h.b16 %v627
        %v665 = vunpack.c.l.b16 %v628
        %v666 = vunpack.c.h.b16 %v628
        %v667 = vunpack.c.l.b16 %v629
        %v668 = vunpack.c.h.b16 %v629
        %v669 = vunpack.c.l.b16 %v630
        %v670 = vunpack.c.h.b16 %v630
        %v671 = vunpack.c.l.b16 %v631
        %v672 = vunpack.c.h.b16 %v631
        %v673 = vunpack.c.l.b16 %v632
        %v674 = vunpack.c.h.b16 %v632
        %v675 = vunpack.c.l.b16 %v633
        %v676 = vunpack.c.h.b16 %v633
        %v677 = vunpack.c.l.b16 %v634
        %v678 = vunpack.c.h.b16 %v634
        %v679 = vunpack.c.l.b16 %v635
        %v680 = vunpack.c.h.b16 %v635
        %v681 = vunpack.c.l.b16 %v636
        %v682 = vunpack.c.h.b16 %v636
        %v683 = vunpack.c.l.b16 %v637
        %v684 = vunpack.c.h.b16 %v637
        %v685 = vunpack.c.l.b16 %v638
        %v686 = vunpack.c.h.b16 %v638
        %v687 = vpack.c.b16 %v655, %v655
        %v688 = vpack.c.b16 %v656, %v656
        %v689 = vpack.c.b16 %v657, %v657
        %v690 = vpack.c.b16 %v658, %v658
        %v691 = vpack.c.b16 %v659, %v659
        %v692 = vpack.c.b16 %v660, %v660
        %v693 = vpack.c.b16 %v661, %v661
        %v694 = vpack.c.b16 %v662, %v662
        %v695 = vpack.c.b16 %v663, %v663
        %v696 = vpack.c.b16 %v664, %v664
        %v697 = vpack.c.b16 %v665, %v665
        %v698 = vpack.c.b16 %v666, %v666
        %v699 = vpack.c.b16 %v667, %v667
        %v700 = vpack.c.b16 %v668, %v668
        %v701 = vpack.c.b16 %v669, %v669
        %v702 = vpack.c.b16 %v670, %v670
        %v703 = vpack.c.b16 %v671, %v671
        %v704 = vpack.c.b16 %v672, %v672
        %v705 = vpack.c.b16 %v673, %v673
        %v706 = vpack.c.b16 %v674, %v674
        %v707 = vpack.c.b16 %v675, %v675
        %v708 = vpack.c.b16 %v676, %v676
        %v709 = vpack.c.b16 %v677, %v677
        %v710 = vpack.c.b16 %v678, %v678
        %v711 = vpack.c.b16 %v679, %v679
        %v712 = vpack.c.b16 %v680, %v680
        %v713 = vpack.c.b16 %v681, %v681
        %v714 = vpack.c.b16 %v682, %v682
        %v715 = vpack.c.b16 %v683, %v683
        %v716 = vpack.c.b16 %v684, %v684
        %v717 = vpack.c.b16 %v685, %v685
        %v718 = vpack.c.b16 %v686, %v686
        %751 = vst [vmem:[%s228] sm:$0xf] %v687
        %752 = vst [vmem:[%s228 + $0x4] sm:$0xf] %v688
        %753 = vst [vmem:[%s228 + $0x8] sm:$0xf] %v689
        %754 = vst [vmem:[%s228 + $0xc] sm:$0xf] %v690
        %755 = vst [vmem:[%s228 + $0x10] sm:$0xf] %v691
        %756 = vst [vmem:[%s228 + $0x14] sm:$0xf] %v692
        %757 = vst [vmem:[%s228 + $0x18] sm:$0xf] %v693
        %758 = vst [vmem:[%s228 + $0x1c] sm:$0xf] %v694
        %759 = vst [vmem:[%s228 + $0x20] sm:$0xf] %v695
        %760 = vst [vmem:[%s228 + $0x24] sm:$0xf] %v696
        %761 = vst [vmem:[%s228 + $0x28] sm:$0xf] %v697
        %762 = vst [vmem:[%s228 + $0x2c] sm:$0xf] %v698
        %763 = vst [vmem:[%s228 + $0x30] sm:$0xf] %v699
        %764 = vst [vmem:[%s228 + $0x34] sm:$0xf] %v700
        %765 = vst [vmem:[%s228 + $0x38] sm:$0xf] %v701
        %766 = vst [vmem:[%s228 + $0x3c] sm:$0xf] %v702
        %767 = vst [vmem:[%s228 + $0x40] sm:$0xf] %v703
        %768 = vst [vmem:[%s228 + $0x44] sm:$0xf] %v704
        %769 = vst [vmem:[%s228 + $0x48] sm:$0xf] %v705
        %770 = vst [vmem:[%s228 + $0x4c] sm:$0xf] %v706
        %771 = vst [vmem:[%s228 + $0x50] sm:$0xf] %v707
        %772 = vst [vmem:[%s228 + $0x54] sm:$0xf] %v708
        %773 = vst [vmem:[%s228 + $0x58] sm:$0xf] %v709
        %774 = vst [vmem:[%s228 + $0x5c] sm:$0xf] %v710
        %775 = vst [vmem:[%s228 + $0x60] sm:$0xf] %v711
        %776 = vst [vmem:[%s228 + $0x64] sm:$0xf] %v712
        %777 = vst [vmem:[%s228 + $0x68] sm:$0xf] %v713
        %778 = vst [vmem:[%s228 + $0x6c] sm:$0xf] %v714
        %779 = vst [vmem:[%s228 + $0x70] sm:$0xf] %v715
        %780 = vst [vmem:[%s228 + $0x74] sm:$0xf] %v716
        %781 = vst [vmem:[%s228 + $0x78] sm:$0xf] %v717
        %782 = vst [vmem:[%s228 + $0x7c] sm:$0xf] %v718
        %s783 = smul.u32 32, %s19
        %p784 = scmp.lt.s32.totalorder %s783, 63
        %s785 = scalar_select %p784, %s783, 63
        %p786 = scmp.lt.s32.totalorder %s20, 0
        %s787 = scalar_select %p786, %s20, 0
        %s788 = sadd.s32 %s787, %s785
        %s789 = smul.addr %s788, 4
        %s790 = scalar_lea.vmem %s3, %s789
        // Predicated region
        $region37: #{_lambda_.3} parent=31 // pred_check
          %p791 = pneg %p125
        $region38: #{_lambda_.3} parent=31 // pred_check_branch
          %793 = sbr.rel (%p791) target = $region40
        $region39: #{_lambda_.3} parent=31 // pred_region
          %s794 = smul.u32 32, %s19
        $region40: #{_lambda_.3} parent=31 // pred_fallthru
          _
      $region32: #{_lambda_.3} parent=5 // pred_fallthru
        _
      %p795 = scmp.le.s32.totalorder 2, %s10
      // Predicated region
      $region41: #{_lambda_.3} parent=5 // pred_check
        %p796 = pneg %p795
      $region42: #{_lambda_.3} parent=5 // pred_check_branch
        %798 = sbr.rel (%p796) target = $region44
      $region43: #{_lambda_.3} parent=5 // pred_region
        %s799 = ssub.s32 %s10, 2
        // Predicated region
        $region45: #{_lambda_.3} parent=43 // pred_check
          %p800 = pneg %p131
        $region46: #{_lambda_.3} parent=43 // pred_check_branch
          %802 = sbr.rel (%p800) target = $region48
        $region47: #{_lambda_.3} parent=43 // pred_region
          %s803 = smul.u32 32, %s21
          %p804 = scmp.lt.s32.totalorder %s803, 63
          %s805 = scalar_select %p804, %s803, 63
          %p806 = scmp.lt.s32.totalorder %s22, 0
          %s807 = scalar_select %p806, %s22, 0
          %s808 = sadd.s32 %s807, %s805
          %s809 = smul.addr %s808, 4
          %s810 = scalar_lea.vmem %s3, %s809
        $region48: #{_lambda_.3} parent=43 // pred_fallthru
          _
      $region44: #{_lambda_.3} parent=5 // pred_fallthru
        _
    $region6: #{_lambda_.3} parent=1 // loop_footer
      %s14 = sadd.s32 1, %s10
    $region7: #{_lambda_.3} parent=1 // loop_footer_branch
      %9 = sbr.rel target = $region3
    $region8: #{_lambda_.3} parent=1 // loop_exit
      _
    %811 = vsyncpa [#allocation3], 1
    %s812 = scalar_lea.sflag [#allocation3], 1
    %813 = vsyncpa %s812, 1

// kernel: _lambda_.4
$region0: #{_lambda_.4}
  #allocation0 [shape = 'u32[]', space=smem, size = 0x4, offset = 0x4, fixed_abs, tag = 'smem constant byte address 0x4 - core index']
  #allocation1 [shape = 'u32[144,128]{1,0:T(1,128)}', space=vmem, size = 0x12000, scoped, tag = 'internal scratch']
  %s0 = inlined_call_operand.vmem [shape: bf16[128,128], index: 0, kind: input, shape index: {}]
  %s1 = inlined_call_operand.hbm [shape: bf16[128,128], index: 1, kind: input, shape index: {}]
  %s2 = inlined_call_operand.vmem [shape: f32[1,128], index: 2, kind: input, shape index: {}]
  %s3 = inlined_call_operand.vmem [shape: bf16[128,128], index: 3, kind: output, shape index: {}]
  %s4 = sld [smem:[#allocation0]]
  $region49: #{_lambda_.4} parent=0
    _
  %s6 = ssub.s32 1, %s4
  %s7 = scalar_select 0, %s6, %s4
  $region1: #{_lambda_.4} parent=0
    #allocation2 [shape = 'u8[32768]{0}', space=vmem, size = 0x8000, scoped, tag = 'input window, operand 1, single buffered']
    #allocation3 [shape = 's32[2]{0}', space=sflag, size = 0x8, scoped, tag = 'scoped memory for _lambda_.4']
    %8 = vsyncpa [#allocation3], 0
    loop: start=0, step=1, limit=4
    $region2: #{_lambda_.4} parent=1 // loop_pre_header
      _
    $region3: #{_lambda_.4} parent=1 // loop_header
      %s10 = sphi 0, %s14
      %p11 = scmp.ge.s32.totalorder %s10, 4
      %s17 = sphi 0, %s29
      %s18 = sphi 0, %s25
      %s19 = sphi 0, %s17
      %s20 = sphi 0, %s18
      %s21 = sphi 0, %s19
      %s22 = sphi 0, %s20
      %s32 = sphi 0, %s34
      %s35 = sphi 0, %s32
      %s36 = sphi 0, %s35
      %s52 = sphi 0, %s36
      %s58 = sphi 0, %s60
      %s61 = sphi 0, %s58
      %s62 = sphi 0, %s61
      %s78 = sphi 0, %s62
      %s84 = sphi 0, %s86
      %s87 = sphi 0, %s84
      %s88 = sphi 0, %s87
      %s104 = sphi 0, %s88
      %s112 = sphi 0, %s114
      %s115 = sphi 0, %s112
      %s116 = sphi 0, %s115
      %s132 = sphi 0, %s116
    $region4: #{_lambda_.4} parent=1 // loop_header_branch
      %13 = sbr.rel (%p11) target = $region8
    $region5: #{_lambda_.4} parent=1 // loop_body
      %s15 = ssub.s32 %s10, 1
      %s16 = ssub.s32 %s10, 2
      %s23 = sadd.s32 1, %s18
      %p24 = scmp.ge.s32.totalorder %s23, 1
      %s25 = scalar_select %p24, 0, %s23
      %s26 = sadd.s32 1, %s17
      %s27 = scalar_select %p24, %s26, %s17
      %p28 = scmp.ge.s32.totalorder %s27, 2
      %s29 = scalar_select %p28, 0, %s27
      %s30 = ssub.s32 %s17, %s29
      %p31 = scmp.eq.s32.totalorder %s30, 0
      %s33 = sadd.s32 %s32, 1
      %s34 = scalar_select %p31, %s32, %s33
      %p37 = pneg %p31
      %p38 = scmp.eq.s32.totalorder %s10, 1
      %p39 = por %p37, %p38
      %p40 = scmp.ne.s32.totalorder %s32, %s35
      %p41 = scmp.eq.s32.totalorder %s10, 0
      %p42 = por %p40, %p41
      %p43 = scmp.ne.s32.totalorder %s32, %s35
      %p44 = scmp.eq.s32.totalorder %s15, 1
      %p45 = por %p43, %p44
      %p46 = scmp.ne.s32.totalorder %s35, %s36
      %p47 = scmp.eq.s32.totalorder %s15, 0
      %p48 = por %p46, %p47
      %p49 = scmp.ne.s32.totalorder %s35, %s36
      %p50 = scmp.eq.s32.totalorder %s16, 1
      %p51 = por %p49, %p50
      %p53 = scmp.ne.s32.totalorder %s36, %s52
      %p54 = scmp.eq.s32.totalorder %s16, 0
      %p55 = por %p53, %p54
      %s56 = ssub.s32 %s18, %s25
      %p57 = scmp.eq.s32.totalorder %s56, 0
      %s59 = sadd.s32 %s58, 1
      %s60 = scalar_select %p57, %s58, %s59
      %p63 = pneg %p57
      %p64 = scmp.eq.s32.totalorder %s10, 1
      %p65 = por %p63, %p64
      %p66 = scmp.ne.s32.totalorder %s58, %s61
      %p67 = scmp.eq.s32.totalorder %s10, 0
      %p68 = por %p66, %p67
      %p69 = scmp.ne.s32.totalorder %s58, %s61
      %p70 = scmp.eq.s32.totalorder %s15, 1
      %p71 = por %p69, %p70
      %p72 = scmp.ne.s32.totalorder %s61, %s62
      %p73 = scmp.eq.s32.totalorder %s15, 0
      %p74 = por %p72, %p73
      %p75 = scmp.ne.s32.totalorder %s61, %s62
      %p76 = scmp.eq.s32.totalorder %s16, 1
      %p77 = por %p75, %p76
      %p79 = scmp.ne.s32.totalorder %s62, %s78
      %p80 = scmp.eq.s32.totalorder %s16, 0
      %p81 = por %p79, %p80
      %s82 = ssub.s32 %s18, %s25
      %p83 = scmp.eq.s32.totalorder %s82, 0
      %s85 = sadd.s32 %s84, 1
      %s86 = scalar_select %p83, %s84, %s85
      %p89 = pneg %p83
      %p90 = scmp.eq.s32.totalorder %s10, 1
      %p91 = por %p89, %p90
      %p92 = scmp.ne.s32.totalorder %s84, %s87
      %p93 = scmp.eq.s32.totalorder %s10, 0
      %p94 = por %p92, %p93
      %p95 = scmp.ne.s32.totalorder %s84, %s87
      %p96 = scmp.eq.s32.totalorder %s15, 1
      %p97 = por %p95, %p96
      %p98 = scmp.ne.s32.totalorder %s87, %s88
      %p99 = scmp.eq.s32.totalorder %s15, 0
      %p100 = por %p98, %p99
      %p101 = scmp.ne.s32.totalorder %s87, %s88
      %p102 = scmp.eq.s32.totalorder %s16, 1
      %p103 = por %p101, %p102
      %p105 = scmp.ne.s32.totalorder %s88, %s104
      %p106 = scmp.eq.s32.totalorder %s16, 0
      %p107 = por %p105, %p106
      %s108 = ssub.s32 %s17, %s29
      %s109 = ssub.s32 %s18, %s25
      %s110 = sor.u32 %s108, %s109
      %p111 = scmp.eq.s32.totalorder %s110, 0
      %s113 = sadd.s32 %s112, 1
      %s114 = scalar_select %p111, %s112, %s113
      %p117 = pneg %p111
      %p118 = scmp.eq.s32.totalorder %s10, 1
      %p119 = por %p117, %p118
      %p120 = scmp.ne.s32.totalorder %s112, %s115
      %p121 = scmp.eq.s32.totalorder %s10, 0
      %p122 = por %p120, %p121
      %p123 = scmp.ne.s32.totalorder %s112, %s115
      %p124 = scmp.eq.s32.totalorder %s15, 1
      %p125 = por %p123, %p124
      %p126 = scmp.ne.s32.totalorder %s115, %s116
      %p127 = scmp.eq.s32.totalorder %s15, 0
      %p128 = por %p126, %p127
      %p129 = scmp.ne.s32.totalorder %s115, %s116
      %p130 = scmp.eq.s32.totalorder %s16, 1
      %p131 = por %p129, %p130
      %p133 = scmp.ne.s32.totalorder %s116, %s132
      %p134 = scmp.eq.s32.totalorder %s16, 0
      %p135 = por %p133, %p134
      %p136 = scmp.le.s32.totalorder 1, %s10
      %p137 = scmp.lt.s32.totalorder %s10, 3
      %p138 = pnand %p136, %p137
      %p139 = pneg %p138
      // Predicated region
      $region9: #{_lambda_.4} parent=5 // pred_check
        _
      $region10: #{_lambda_.4} parent=5 // pred_check_branch
        %141 = sbr.rel (%p138) target = $region12
      $region11: #{_lambda_.4} parent=5 // pred_region
        %s142 = ssub.s32 %s10, 1
        // Predicated region
        $region13: #{_lambda_.4} parent=11 // pred_check
          %p143 = pneg %p74
        $region14: #{_lambda_.4} parent=11 // pred_check_branch
          %145 = sbr.rel (%p143) target = $region16
        $region15: #{_lambda_.4} parent=11 // pred_region
          %s147 = ssub.s32 1024, 1024
          %148 = vsyncadd [#allocation3], %s147
          %s149 = smul.addr %s20, 64
          %s150 = scalar_lea.hbm %s1, %s149
          %s151 = sshll.u32 [#allocation2], 4
          %s152 = int_to_ptr.vmem [resolvable:$true] %s151
          %157 = dma.hbm_to_vmem [thread:$0]  %s150, 1024, %s152, [#allocation3], 64, 64, 4
        $region16: #{_lambda_.4} parent=11 // pred_fallthru
          _
        // Predicated region
        $region17: #{_lambda_.4} parent=11 // pred_check
          %p158 = pneg %p100
        $region18: #{_lambda_.4} parent=11 // pred_check_branch
          %160 = sbr.rel (%p158) target = $region20
        $region19: #{_lambda_.4} parent=11 // pred_region
          %p161 = scmp.lt.s32.totalorder %s20, 0
          %s162 = scalar_select %p161, %s20, 0
          %s163 = scalar_lea.vmem %s2, %s162
        $region20: #{_lambda_.4} parent=11 // pred_fallthru
          _
      $region12: #{_lambda_.4} parent=5 // pred_fallthru
        _
      %p164 = scmp.lt.s32.totalorder %s10, 2
      // Predicated region
      $region21: #{_lambda_.4} parent=5 // pred_check
        %p165 = pneg %p164
      $region22: #{_lambda_.4} parent=5 // pred_check_branch
        %167 = sbr.rel (%p165) target = $region24
      $region23: #{_lambda_.4} parent=5 // pred_region
        // Predicated region
        $region25: #{_lambda_.4} parent=23 // pred_check
          %p168 = pneg %p42
        $region26: #{_lambda_.4} parent=23 // pred_check_branch
          %170 = sbr.rel (%p168) target = $region28
        $region27: #{_lambda_.4} parent=23 // pred_region
          %s171 = smul.u32 8, %s17
          %p172 = scmp.lt.s32.totalorder %s171, 15
          %s173 = scalar_select %p172, %s171, 15
          %s174 = smul.addr %s173, 4
          %s175 = scalar_lea.vmem %s0, %s174
          %s176 = smul.u32 8, %s17
        $region28: #{_lambda_.4} parent=23 // pred_fallthru
          _
      $region24: #{_lambda_.4} parent=5 // pred_fallthru
        _
      %p177 = scmp.le.s32.totalorder 1, %s10
      %p178 = scmp.lt.s32.totalorder %s10, 3
      %p179 = pnand %p177, %p178
      %p180 = pneg %p179
      // Predicated region
      $region29: #{_lambda_.4} parent=5 // pred_check
        _
      $region30: #{_lambda_.4} parent=5 // pred_check_branch
        %182 = sbr.rel (%p179) target = $region32
      $region31: #{_lambda_.4} parent=5 // pred_region
        %s183 = ssub.s32 %s10, 1
        // Predicated region
        $region33: #{_lambda_.4} parent=31 // pred_check
          %p184 = pneg %p74
        $region34: #{_lambda_.4} parent=31 // pred_check_branch
          %186 = sbr.rel (%p184) target = $region36
        $region35: #{_lambda_.4} parent=31 // pred_region
          %187 = dma.done [#allocation3], 1024
        $region36: #{_lambda_.4} parent=31 // pred_fallthru
          _
        %s188 = smul.u32 8, %s19
        %p189 = scmp.lt.s32.totalorder %s188, 15
        %s190 = scalar_select %p189, %s188, 15
        %s191 = smul.addr %s190, 4
        %s192 = scalar_lea.vmem %s0, %s191
        %p193 = pneg %p48
        %p194 = pneg %p45
        %p195 = pneg %p74
        %p196 = pneg %p71
        %p197 = scmp.lt.s32.totalorder %s20, 0
        %s198 = scalar_select %p197, %s20, 0
        %s199 = scalar_lea.vmem %s2, %s198
        %p200 = pneg %p100
        %p201 = pneg %p97
        %p202 = pneg %p128
        %p203 = pneg %p125
        %s204 = smul.u32 8, %s19
        %p205 = scmp.lt.s32.totalorder %s204, 15
        %s206 = scalar_select %p205, %s204, 15
        %p207 = scmp.lt.s32.totalorder %s20, 0
        %s208 = scalar_select %p207, %s20, 0
        %s209 = sadd.s32 %s208, %s206
        %s210 = smul.addr %s209, 4
        %s211 = scalar_lea.vmem %s3, %s210
        %s212 = smul.u32 8, %s19
        %p213 = scmp.lt.s32.totalorder %s212, 15
        %s214 = scalar_select %p213, %s212, 15
        %s215 = smul.addr %s214, 4
        %s216 = scalar_lea.vmem %s0, %s215
        %s217 = smul.u32 8, %s19
        %p218 = scmp.lt.s32.totalorder %s20, 0
        %s219 = scalar_select %p218, %s20, 0
        %s220 = scalar_lea.vmem %s2, %s219
        %s221 = smul.u32 8, %s19
        %p222 = scmp.lt.s32.totalorder %s221, 15
        %s223 = scalar_select %p222, %s221, 15
        %p224 = scmp.lt.s32.totalorder %s20, 0
        %s225 = scalar_select %p224, %s20, 0
        %s226 = sadd.s32 %s225, %s223
        %s227 = smul.addr %s226, 4
        %s228 = scalar_lea.vmem %s3, %s227
        %s229 = smul.u32 8, %s19
        %v231 = vld [vmem:[%s216] sm:$0xf]
        %v232 = vld [vmem:[%s216 + $0x4] sm:$0xf]
        %v233 = vld [vmem:[%s216 + $0x8] sm:$0xf]
        %v234 = vld [vmem:[%s216 + $0xc] sm:$0xf]
        %v235 = vld [vmem:[%s216 + $0x10] sm:$0xf]
        %v236 = vld [vmem:[%s216 + $0x14] sm:$0xf]
        %v237 = vld [vmem:[%s216 + $0x18] sm:$0xf]
        %v238 = vld [vmem:[%s216 + $0x1c] sm:$0xf]
        %v239 = vld [vmem:[#allocation2] sm:$0xf]
        %v240 = vld [vmem:[#allocation2 + $0x4] sm:$0xf]
        %v241 = vld [vmem:[#allocation2 + $0x8] sm:$0xf]
        %v242 = vld [vmem:[#allocation2 + $0xc] sm:$0xf]
        %v243 = vld [vmem:[#allocation2 + $0x10] sm:$0xf]
        %v244 = vld [vmem:[#allocation2 + $0x14] sm:$0xf]
        %v245 = vld [vmem:[#allocation2 + $0x18] sm:$0xf]
        %v246 = vld [vmem:[#allocation2 + $0x1c] sm:$0xf]
        %v247 = vld [vmem:[#allocation2 + $0x20] sm:$0xf]
        %v248 = vld [vmem:[#allocation2 + $0x24] sm:$0xf]
        %v249 = vld [vmem:[#allocation2 + $0x28] sm:$0xf]
        %v250 = vld [vmem:[#allocation2 + $0x2c] sm:$0xf]
        %v251 = vld [vmem:[#allocation2 + $0x30] sm:$0xf]
        %v252 = vld [vmem:[#allocation2 + $0x34] sm:$0xf]
        %v253 = vld [vmem:[#allocation2 + $0x38] sm:$0xf]
        %v254 = vld [vmem:[#allocation2 + $0x3c] sm:$0xf]
        %v255 = vld [vmem:[%s220] sm:$0x1]
        %v257 = vlaneseq
        %v258 = vshrl.u32 %v257, 7
        %v259 = vsub.s32 0, %v258
        %v260 = vrot.slane %v255, %v259
        %v270 = vunpack.c.l.b16 %v231
        %v271 = vunpack.c.l.b16 %v232
        %v272 = vunpack.c.l.b16 %v233
        %v273 = vunpack.c.l.b16 %v234
        %v274 = vunpack.c.l.b16 %v235
        %v275 = vunpack.c.l.b16 %v236
        %v276 = vunpack.c.l.b16 %v237
        %v277 = vunpack.c.l.b16 %v238
        %v278 = vpack.c.b16 %v271, %v270
        %v279 = vpack.c.b16 %v273, %v272
        %v280 = vpack.c.b16 %v275, %v274
        %v281 = vpack.c.b16 %v277, %v276
        %v302 = vunpack.c.l.b16 %v239
        %v303 = vunpack.c.l.b16 %v240
        %v304 = vunpack.c.l.b16 %v241
        %v305 = vunpack.c.l.b16 %v242
        %v306 = vunpack.c.l.b16 %v243
        %v307 = vunpack.c.l.b16 %v244
        %v308 = vunpack.c.l.b16 %v245
        %v309 = vunpack.c.l.b16 %v246
        %v310 = vunpack.c.l.b16 %v247
        %v311 = vunpack.c.l.b16 %v248
        %v312 = vunpack.c.l.b16 %v249
        %v313 = vunpack.c.l.b16 %v250
        %v314 = vunpack.c.l.b16 %v251
        %v315 = vunpack.c.l.b16 %v252
        %v316 = vunpack.c.l.b16 %v253
        %v317 = vunpack.c.l.b16 %v254
        %v318 = vpack.c.b16 %v303, %v302
        %v319 = vpack.c.b16 %v305, %v304
        %v320 = vpack.c.b16 %v307, %v306
        %v321 = vpack.c.b16 %v309, %v308
        %v322 = vpack.c.b16 %v311, %v310
        %v323 = vpack.c.b16 %v313, %v312
        %v324 = vpack.c.b16 %v315, %v314
        %v325 = vpack.c.b16 %v317, %v316
        %334 = vmatprep.subr.bf16.mxu0 0
        %335 = vmatpush1.bf16.msra.mxu0 %v318
        %336 = vmatprep.subr.bf16.mxu0 0
        %337 = vmatpush1.bf16.msra.mxu0 %v319
        %338 = vmatprep.subr.bf16.mxu0 0
        %339 = vmatpush1.bf16.msra.mxu0 %v320
        %340 = vmatprep.subr.bf16.mxu0 0
        %341 = vmatpush1.bf16.msra.mxu0 %v321
        %342 = vmatprep.subr.bf16.mxu0 0
        %343 = vmatpush1.bf16.msra.mxu0 %v322
        %344 = vmatprep.subr.bf16.mxu0 0
        %345 = vmatpush1.bf16.msra.mxu0 %v323
        %346 = vmatprep.subr.bf16.mxu0 0
        %347 = vmatpush1.bf16.msra.mxu0 %v324
        %348 = vmatprep.subr.bf16.mxu0 0
        %349 = vmatpush1.bf16.msra.mxu0 %v325
        %350 = vmatprep.subr.bf16.mxu0 0
        %351 = vmatpush1.bf16.msra.mxu0 0
        %352 = vmatprep.subr.bf16.mxu0 0
        %353 = vmatpush1.bf16.msra.mxu0 0
        %354 = vmatprep.subr.bf16.mxu0 0
        %355 = vmatpush1.bf16.msra.mxu0 0
        %356 = vmatprep.subr.bf16.mxu0 0
        %357 = vmatpush1.bf16.msra.mxu0 0
        %358 = vmatprep.subr.bf16.mxu0 0
        %359 = vmatpush1.bf16.msra.mxu0 0
        %360 = vmatprep.subr.bf16.mxu0 0
        %361 = vmatpush1.bf16.msra.mxu0 0
        %362 = vmatprep.subr.bf16.mxu0 0
        %363 = vmatpush1.bf16.msra.mxu0 0
        %364 = vmatprep.subr.bf16.mxu0 0
        %365 = vmatpush1.bf16.msra.mxu0 0
        %366 = vmatprep.mubr.bf16.mxu0 0
        %367 = vmatmul.mubr.bf16.gmra.mrb[0].mxu0 %v278
        %v368 = vpop.f32.mrb[0].mxu0
        %v369 = vadd.f32 %v260, %v368
        %v370 = vpop.f32.mrb[0].mxu0
        %v371 = vpop.f32.mrb[0].mxu0
        %v372 = vadd.f32 %v260, %v371
        %v373 = vpop.f32.mrb[0].mxu0
        %374 = vmatprep.mubr.bf16.mxu0 0
        %375 = vmatmul.mubr.bf16.gmra.mrb[0].mxu0 %v279
        %v376 = vpop.f32.mrb[0].mxu0
        %v377 = vadd.f32 %v260, %v376
        %v378 = vpop.f32.mrb[0].mxu0
        %v379 = vpop.f32.mrb[0].mxu0
        %v380 = vadd.f32 %v260, %v379
        %v381 = vpop.f32.mrb[0].mxu0
        %382 = vmatprep.mubr.bf16.mxu0 0
        %383 = vmatmul.mubr.bf16.gmra.mrb[0].mxu0 %v280
        %v384 = vpop.f32.mrb[0].mxu0
        %v385 = vadd.f32 %v260, %v384
        %v386 = vpop.f32.mrb[0].mxu0
        %v387 = vpop.f32.mrb[0].mxu0
        %v388 = vadd.f32 %v260, %v387
        %v389 = vpop.f32.mrb[0].mxu0
        %390 = vmatprep.mubr.bf16.mxu0 0
        %391 = vmatmul.mubr.bf16.gmra.mrb[0].mxu0 %v281
        %v392 = vpop.f32.mrb[0].mxu0
        %v393 = vadd.f32 %v260, %v392
        %v394 = vpop.f32.mrb[0].mxu0
        %v395 = vpop.f32.mrb[0].mxu0
        %v396 = vadd.f32 %v260, %v395
        %v397 = vpop.f32.mrb[0].mxu0
        %398 = vdwg.mxu0
        %v399 = vmax.f32 %v369, 0.0
        %v400 = vmax.f32 %v372, 0.0
        %v401 = vmax.f32 %v377, 0.0
        %v402 = vmax.f32 %v380, 0.0
        %v403 = vmax.f32 %v385, 0.0
        %v404 = vmax.f32 %v388, 0.0
        %v405 = vmax.f32 %v393, 0.0
        %v406 = vmax.f32 %v396, 0.0
        %v407 = vpack.c.bf16 %v400, %v399
        %v408 = vpack.c.bf16 %v402, %v401
        %v409 = vpack.c.bf16 %v404, %v403
        %v410 = vpack.c.bf16 %v406, %v405
        %v415 = vunpack.c.l.b16 %v407
        %v416 = vunpack.c.h.b16 %v407
        %v417 = vunpack.c.l.b16 %v408
        %v418 = vunpack.c.h.b16 %v408
        %v419 = vunpack.c.l.b16 %v409
        %v420 = vunpack.c.h.b16 %v409
        %v421 = vunpack.c.l.b16 %v410
        %v422 = vunpack.c.h.b16 %v410
        %v423 = vpack.c.b16 %v415, %v415
        %v424 = vpack.c.b16 %v416, %v416
        %v425 = vpack.c.b16 %v417, %v417
        %v426 = vpack.c.b16 %v418, %v418
        %v427 = vpack.c.b16 %v419, %v419
        %v428 = vpack.c.b16 %v420, %v420
        %v429 = vpack.c.b16 %v421, %v421
        %v430 = vpack.c.b16 %v422, %v422
        %439 = vst [vmem:[%s228] sm:$0xf] %v423
        %440 = vst [vmem:[%s228 + $0x4] sm:$0xf] %v424
        %441 = vst [vmem:[%s228 + $0x8] sm:$0xf] %v425
        %442 = vst [vmem:[%s228 + $0xc] sm:$0xf] %v426
        %443 = vst [vmem:[%s228 + $0x10] sm:$0xf] %v427
        %444 = vst [vmem:[%s228 + $0x14] sm:$0xf] %v428
        %445 = vst [vmem:[%s228 + $0x18] sm:$0xf] %v429
        %446 = vst [vmem:[%s228 + $0x1c] sm:$0xf] %v430
        %s447 = smul.u32 8, %s19
        %p448 = scmp.lt.s32.totalorder %s447, 15
        %s449 = scalar_select %p448, %s447, 15
        %p450 = scmp.lt.s32.totalorder %s20, 0
        %s451 = scalar_select %p450, %s20, 0
        %s452 = sadd.s32 %s451, %s449
        %s453 = smul.addr %s452, 4
        %s454 = scalar_lea.vmem %s3, %s453
        // Predicated region
        $region37: #{_lambda_.4} parent=31 // pred_check
          %p455 = pneg %p125
        $region38: #{_lambda_.4} parent=31 // pred_check_branch
          %457 = sbr.rel (%p455) target = $region40
        $region39: #{_lambda_.4} parent=31 // pred_region
          %s458 = smul.u32 8, %s19
        $region40: #{_lambda_.4} parent=31 // pred_fallthru
          _
      $region32: #{_lambda_.4} parent=5 // pred_fallthru
        _
      %p459 = scmp.le.s32.totalorder 2, %s10
      // Predicated region
      $region41: #{_lambda_.4} parent=5 // pred_check
        %p460 = pneg %p459
      $region42: #{_lambda_.4} parent=5 // pred_check_branch
        %462 = sbr.rel (%p460) target = $region44
      $region43: #{_lambda_.4} parent=5 // pred_region
        %s463 = ssub.s32 %s10, 2
        // Predicated region
        $region45: #{_lambda_.4} parent=43 // pred_check
          %p464 = pneg %p131
        $region46: #{_lambda_.4} parent=43 // pred_check_branch
          %466 = sbr.rel (%p464) target = $region48
        $region47: #{_lambda_.4} parent=43 // pred_region
          %s467 = smul.u32 8, %s21
          %p468 = scmp.lt.s32.totalorder %s467, 15
          %s469 = scalar_select %p468, %s467, 15
          %p470 = scmp.lt.s32.totalorder %s22, 0
          %s471 = scalar_select %p470, %s22, 0
          %s472 = sadd.s32 %s471, %s469
          %s473 = smul.addr %s472, 4
          %s474 = scalar_lea.vmem %s3, %s473
        $region48: #{_lambda_.4} parent=43 // pred_fallthru
          _
      $region44: #{_lambda_.4} parent=5 // pred_fallthru
        _
    $region6: #{_lambda_.4} parent=1 // loop_footer
      %s14 = sadd.s32 1, %s10
    $region7: #{_lambda_.4} parent=1 // loop_footer_branch
      %9 = sbr.rel target = $region3
    $region8: #{_lambda_.4} parent=1 // loop_exit
      _
    %475 = vsyncpa [#allocation3], 1
    %s476 = scalar_lea.sflag [#allocation3], 1
    %477 = vsyncpa %s476, 1

// kernel: _lambda_.5
$region0: #{_lambda_.5}
  #allocation0 [shape = 'u32[]', space=smem, size = 0x4, offset = 0x4, fixed_abs, tag = 'smem constant byte address 0x4 - core index']
  #allocation1 [shape = 'u32[144,128]{1,0:T(1,128)}', space=vmem, size = 0x12000, scoped, tag = 'internal scratch']
  %s0 = inlined_call_operand.vmem [shape: bf16[128,640], index: 0, kind: input, shape index: {}]
  %s1 = inlined_call_operand.vmem [shape: bf16[640,256], index: 1, kind: input, shape index: {}]
  %s2 = inlined_call_operand.vmem [shape: f32[1,256], index: 2, kind: input, shape index: {}]
  %s3 = inlined_call_operand.vmem [shape: bf16[128,256], index: 3, kind: output, shape index: {}]
  %s4 = sld [smem:[#allocation0]]
  $region123: #{_lambda_.5} parent=0
    _
  %s6 = ssub.s32 1, %s4
  %s7 = scalar_select 0, %s6, %s4
  $region1: #{_lambda_.5} parent=0
    #allocation2 [shape = 'u8[327680]{0}', space=vmem, size = 0x50000, scoped, tag = 'input window, operand 1']
    #allocation3 [shape = 'u8[65536]{0}', space=vmem, size = 0x10000, scoped, tag = 'output window, operand 0']
    loop: start=0, step=1, limit=4
    $region2: #{_lambda_.5} parent=1 // loop_pre_header
      _
    $region3: #{_lambda_.5} parent=1 // loop_header
      %s9 = sphi 0, %s13
      %p10 = scmp.ge.s32.totalorder %s9, 4
      %s16 = sphi 0, %s28
      %s17 = sphi 0, %s24
      %s18 = sphi 0, %s16
      %s19 = sphi 0, %s17
      %s20 = sphi 0, %s18
      %s21 = sphi 0, %s19
      %s31 = sphi 0, %s33
      %s34 = sphi 0, %s31
      %s35 = sphi 0, %s34
      %s51 = sphi 0, %s35
      %s57 = sphi 0, %s59
      %s60 = sphi 0, %s57
      %s61 = sphi 0, %s60
      %s77 = sphi 0, %s61
      %s83 = sphi 0, %s85
      %s86 = sphi 0, %s83
      %s87 = sphi 0, %s86
      %s103 = sphi 0, %s87
      %s111 = sphi 0, %s113
      %s114 = sphi 0, %s111
      %s115 = sphi 0, %s114
      %s131 = sphi 0, %s115
    $region4: #{_lambda_.5} parent=1 // loop_header_branch
      %12 = sbr.rel (%p10) target = $region8
    $region5: #{_lambda_.5} parent=1 // loop_body
      %s14 = ssub.s32 %s9, 1
      %s15 = ssub.s32 %s9, 2
      %s22 = sadd.s32 1, %s17
      %p23 = scmp.ge.s32.totalorder %s22, 2
      %s24 = scalar_select %p23, 0, %s22
      %s25 = sadd.s32 1, %s16
      %s26 = scalar_select %p23, %s25, %s16
      %p27 = scmp.ge.s32.totalorder %s26, 1
      %s28 = scalar_select %p27, 0, %s26
      %s29 = ssub.s32 %s16, %s28
      %p30 = scmp.eq.s32.totalorder %s29, 0
      %s32 = sadd.s32 %s31, 1
      %s33 = scalar_select %p30, %s31, %s32
      %p36 = pneg %p30
      %p37 = scmp.eq.s32.totalorder %s9, 1
      %p38 = por %p36, %p37
      %p39 = scmp.ne.s32.totalorder %s31, %s34
      %p40 = scmp.eq.s32.totalorder %s9, 0
      %p41 = por %p39, %p40
      %p42 = scmp.ne.s32.totalorder %s31, %s34
      %p43 = scmp.eq.s32.totalorder %s14, 1
      %p44 = por %p42, %p43
      %p45 = scmp.ne.s32.totalorder %s34, %s35
      %p46 = scmp.eq.s32.totalorder %s14, 0
      %p47 = por %p45, %p46
      %p48 = scmp.ne.s32.totalorder %s34, %s35
      %p49 = scmp.eq.s32.totalorder %s15, 1
      %p50 = por %p48, %p49
      %p52 = scmp.ne.s32.totalorder %s35, %s51
      %p53 = scmp.eq.s32.totalorder %s15, 0
      %p54 = por %p52, %p53
      %s55 = ssub.s32 %s17, %s24
      %p56 = scmp.eq.s32.totalorder %s55, 0
      %s58 = sadd.s32 %s57, 1
      %s59 = scalar_select %p56, %s57, %s58
      %p62 = pneg %p56
      %p63 = scmp.eq.s32.totalorder %s9, 1
      %p64 = por %p62, %p63
      %p65 = scmp.ne.s32.totalorder %s57, %s60
      %p66 = scmp.eq.s32.totalorder %s9, 0
      %p67 = por %p65, %p66
      %p68 = scmp.ne.s32.totalorder %s57, %s60
      %p69 = scmp.eq.s32.totalorder %s14, 1
      %p70 = por %p68, %p69
      %p71 = scmp.ne.s32.totalorder %s60, %s61
      %p72 = scmp.eq.s32.totalorder %s14, 0
      %p73 = por %p71, %p72
      %p74 = scmp.ne.s32.totalorder %s60, %s61
      %p75 = scmp.eq.s32.totalorder %s15, 1
      %p76 = por %p74, %p75
      %p78 = scmp.ne.s32.totalorder %s61, %s77
      %p79 = scmp.eq.s32.totalorder %s15, 0
      %p80 = por %p78, %p79
      %s81 = ssub.s32 %s17, %s24
      %p82 = scmp.eq.s32.totalorder %s81, 0
      %s84 = sadd.s32 %s83, 1
      %s85 = scalar_select %p82, %s83, %s84
      %p88 = pneg %p82
      %p89 = scmp.eq.s32.totalorder %s9, 1
      %p90 = por %p88, %p89
      %p91 = scmp.ne.s32.totalorder %s83, %s86
      %p92 = scmp.eq.s32.totalorder %s9, 0
      %p93 = por %p91, %p92
      %p94 = scmp.ne.s32.totalorder %s83, %s86
      %p95 = scmp.eq.s32.totalorder %s14, 1
      %p96 = por %p94, %p95
      %p97 = scmp.ne.s32.totalorder %s86, %s87
      %p98 = scmp.eq.s32.totalorder %s14, 0
      %p99 = por %p97, %p98
      %p100 = scmp.ne.s32.totalorder %s86, %s87
      %p101 = scmp.eq.s32.totalorder %s15, 1
      %p102 = por %p100, %p101
      %p104 = scmp.ne.s32.totalorder %s87, %s103
      %p105 = scmp.eq.s32.totalorder %s15, 0
      %p106 = por %p104, %p105
      %s107 = ssub.s32 %s16, %s28
      %s108 = ssub.s32 %s17, %s24
      %s109 = sor.u32 %s107, %s108
      %p110 = scmp.eq.s32.totalorder %s109, 0
      %s112 = sadd.s32 %s111, 1
      %s113 = scalar_select %p110, %s111, %s112
      %p116 = pneg %p110
      %p117 = scmp.eq.s32.totalorder %s9, 1
      %p118 = por %p116, %p117
      %p119 = scmp.ne.s32.totalorder %s111, %s114
      %p120 = scmp.eq.s32.totalorder %s9, 0
      %p121 = por %p119, %p120
      %p122 = scmp.ne.s32.totalorder %s111, %s114
      %p123 = scmp.eq.s32.totalorder %s14, 1
      %p124 = por %p122, %p123
      %p125 = scmp.ne.s32.totalorder %s114, %s115
      %p126 = scmp.eq.s32.totalorder %s14, 0
      %p127 = por %p125, %p126
      %p128 = scmp.ne.s32.totalorder %s114, %s115
      %p129 = scmp.eq.s32.totalorder %s15, 1
      %p130 = por %p128, %p129
      %p132 = scmp.ne.s32.totalorder %s115, %s131
      %p133 = scmp.eq.s32.totalorder %s15, 0
      %p134 = por %p132, %p133
      %p135 = scmp.le.s32.totalorder 1, %s9
      %p136 = scmp.lt.s32.totalorder %s9, 3
      %p137 = pnand %p135, %p136
      %p138 = pneg %p137
      // Predicated region
      $region9: #{_lambda_.5} parent=5 // pred_check
        _
      $region10: #{_lambda_.5} parent=5 // pred_check_branch
        %140 = sbr.rel (%p137) target = $region12
      $region11: #{_lambda_.5} parent=5 // pred_region
        %s141 = ssub.s32 %s9, 1
        // Predicated region
        $region13: #{_lambda_.5} parent=11 // pred_check
          %p142 = pneg %p47
        $region14: #{_lambda_.5} parent=11 // pred_check_branch
          %144 = sbr.rel (%p142) target = $region16
        $region15: #{_lambda_.5} parent=11 // pred_region
          %s145 = smul.u32 16, %s18
          %p146 = scmp.lt.s32.totalorder %s145, 15
          %s147 = scalar_select %p146, %s145, 15
          %s148 = smul.addr %s147, 5
          %s149 = smul.addr %s148, 4
          %s150 = scalar_lea.vmem %s0, %s149
          %s151 = smul.u32 16, %s18
        $region16: #{_lambda_.5} parent=11 // pred_fallthru
          _
      $region12: #{_lambda_.5} parent=5 // pred_fallthru
        _
      %p152 = scmp.lt.s32.totalorder %s9, 2
      // Predicated region
      $region17: #{_lambda_.5} parent=5 // pred_check
        %p153 = pneg %p152
      $region18: #{_lambda_.5} parent=5 // pred_check_branch
        %155 = sbr.rel (%p153) target = $region20
      $region19: #{_lambda_.5} parent=5 // pred_region
        // Predicated region
        $region21: #{_lambda_.5} parent=19 // pred_check
          %p156 = pneg %p67
        $region22: #{_lambda_.5} parent=19 // pred_check_branch
          %158 = sbr.rel (%p156) target = $region24
        $region23: #{_lambda_.5} parent=19 // pred_region
          %s159 = sand.u32 %s57, 1
          %s160 = sand.u32 %s57, 1
          %s161 = smul.addr %s160, 320
          %s162 = scalar_lea.vmem [#allocation2], %s161
          %s163 = smul.addr %s17, 4
          %s164 = scalar_lea.vmem %s1, %s163
          // Predicated region
          $region25: #{_lambda_.5} parent=23 // pred_check
            _
          $region26: #{_lambda_.5} parent=23 // pred_check_branch
            %166 = sbr.rel (0) target = $region28
          $region27: #{_lambda_.5} parent=23 // pred_region
            // Predicated region
            $region29: #{_lambda_.5} parent=27 // pred_check
              _
            $region30: #{_lambda_.5} parent=27 // pred_check_branch
              %168 = sbr.rel target = $region32
            $region31: #{_lambda_.5} parent=27 // pred_region
              // Predicated region
              $region44: #{_lambda_.5} parent=31 // pred_check
                _
              $region45: #{_lambda_.5} parent=31 // pred_check_branch
                %341 = sbr.rel (0) target = $region47
              $region46: #{_lambda_.5} parent=31 // pred_region
                loop: start=0, step=1, limit=1
                $region48: #{_lambda_.5} parent=46 // loop_pre_header
                  _
                $region49: #{_lambda_.5} parent=46 // loop_header
                  %s343 = sphi 0, %s347
                  %p344 = scmp.ge.s32.totalorder %s343, 1
                  %s348 = sphi %s164, %s164
                  %s349 = sphi %s162, %s162
                $region50: #{_lambda_.5} parent=46 // loop_header_branch
                  %346 = sbr.rel (%p344) target = $region54
                $region51: #{_lambda_.5} parent=46 // loop_body
                  _
                $region52: #{_lambda_.5} parent=46 // loop_footer
                  %s347 = sadd.s32 1, %s343
                $region53: #{_lambda_.5} parent=46 // loop_footer_branch
                  %342 = sbr.rel target = $region49
                $region54: #{_lambda_.5} parent=46 // loop_exit
                  _
                loop: start=0, step=1, limit=1
                $region55: #{_lambda_.5} parent=46 // loop_pre_header
                  _
                $region56: #{_lambda_.5} parent=46 // loop_header
                  %s352 = sphi 0, %s356
                  %p353 = scmp.ge.s32.totalorder %s352, 1
                  %s357 = sphi %s164, %s164
                  %s358 = sphi %s162, %s162
                $region57: #{_lambda_.5} parent=46 // loop_header_branch
                  %355 = sbr.rel (%p353) target = $region61
                $region58: #{_lambda_.5} parent=46 // loop_body
                  %v359 = vld [vmem:[%s357] sm:$0xf]
                  %360 = vst [vmem:[%s358] sm:$0xf] %v359
                  %v361 = vld [vmem:[%s357 + $0x8] sm:$0xf]
                  %362 = vst [vmem:[%s358 + $0x4] sm:$0xf] %v361
                  %v363 = vld [vmem:[%s357 + $0x10] sm:$0xf]
                  %364 = vst [vmem:[%s358 + $0x8] sm:$0xf] %v363
                  %v365 = vld [vmem:[%s357 + $0x18] sm:$0xf]
                  %366 = vst [vmem:[%s358 + $0xc] sm:$0xf] %v365
                  %v367 = vld [vmem:[%s357 + $0x20] sm:$0xf]
                  %368 = vst [vmem:[%s358 + $0x10] sm:$0xf] %v367
                  %v369 = vld [vmem:[%s357 + $0x28] sm:$0xf]
                  %370 = vst [vmem:[%s358 + $0x14] sm:$0xf] %v369
                  %v371 = vld [vmem:[%s357 + $0x30] sm:$0xf]
                  %372 = vst [vmem:[%s358 + $0x18] sm:$0xf] %v371
                  %v373 = vld [vmem:[%s357 + $0x38] sm:$0xf]
                  %374 = vst [vmem:[%s358 + $0x1c] sm:$0xf] %v373
                  %v375 = vld [vmem:[%s357 + $0x40] sm:$0xf]
                  %376 = vst [vmem:[%s358 + $0x20] sm:$0xf] %v375
                  %v377 = vld [vmem:[%s357 + $0x48] sm:$0xf]
                  %378 = vst [vmem:[%s358 + $0x24] sm:$0xf] %v377
                  %v379 = vld [vmem:[%s357 + $0x50] sm:$0xf]
                  %380 = vst [vmem:[%s358 + $0x28] sm:$0xf] %v379
                  %v381 = vld [vmem:[%s357 + $0x58] sm:$0xf]
                  %382 = vst [vmem:[%s358 + $0x2c] sm:$0xf] %v381
                  %v383 = vld [vmem:[%s357 + $0x60] sm:$0xf]
                  %384 = vst [vmem:[%s358 + $0x30] sm:$0xf] %v383
                  %v385 = vld [vmem:[%s357 + $0x68] sm:$0xf]
                  %386 = vst [vmem:[%s358 + $0x34] sm:$0xf] %v385
                  %v387 = vld [vmem:[%s357 + $0x70] sm:$0xf]
                  %388 = vst [vmem:[%s358 + $0x38] sm:$0xf] %v387
                  %v389 = vld [vmem:[%s357 + $0x78] sm:$0xf]
                  %390 = vst [vmem:[%s358 + $0x3c] sm:$0xf] %v389
                  %v391 = vld [vmem:[%s357 + $0x80] sm:$0xf]
                  %392 = vst [vmem:[%s358 + $0x40] sm:$0xf] %v391
                  %v393 = vld [vmem:[%s357 + $0x88] sm:$0xf]
                  %394 = vst [vmem:[%s358 + $0x44] sm:$0xf] %v393
                  %v395 = vld [vmem:[%s357 + $0x90] sm:$0xf]
                  %396 = vst [vmem:[%s358 + $0x48] sm:$0xf] %v395
                  %v397 = vld [vmem:[%s357 + $0x98] sm:$0xf]
                  %398 = vst [vmem:[%s358 + $0x4c] sm:$0xf] %v397
                  %v399 = vld [vmem:[%s357 + $0xa0] sm:$0xf]
                  %400 = vst [vmem:[%s358 + $0x50] sm:$0xf] %v399
                  %v401 = vld [vmem:[%s357 + $0xa8] sm:$0xf]
                  %402 = vst [vmem:[%s358 + $0x54] sm:$0xf] %v401
                  %v403 = vld [vmem:[%s357 + $0xb0] sm:$0xf]
                  %404 = vst [vmem:[%s358 + $0x58] sm:$0xf] %v403
                  %v405 = vld [vmem:[%s357 + $0xb8] sm:$0xf]
                  %406 = vst [vmem:[%s358 + $0x5c] sm:$0xf] %v405
                  %v407 = vld [vmem:[%s357 + $0xc0] sm:$0xf]
                  %408 = vst [vmem:[%s358 + $0x60] sm:$0xf] %v407
                  %v409 = vld [vmem:[%s357 + $0xc8] sm:$0xf]
                  %410 = vst [vmem:[%s358 + $0x64] sm:$0xf] %v409
                  %v411 = vld [vmem:[%s357 + $0xd0] sm:$0xf]
                  %412 = vst [vmem:[%s358 + $0x68] sm:$0xf] %v411
                  %v413 = vld [vmem:[%s357 + $0xd8] sm:$0xf]
                  %414 = vst [vmem:[%s358 + $0x6c] sm:$0xf] %v413
                  %v415 = vld [vmem:[%s357 + $0xe0] sm:$0xf]
                  %416 = vst [vmem:[%s358 + $0x70] sm:$0xf] %v415
                  %v417 = vld [vmem:[%s357 + $0xe8] sm:$0xf]
                  %418 = vst [vmem:[%s358 + $0x74] sm:$0xf] %v417
                  %v419 = vld [vmem:[%s357 + $0xf0] sm:$0xf]
                  %420 = vst [vmem:[%s358 + $0x78] sm:$0xf] %v419
                  %v421 = vld [vmem:[%s357 + $0xf8] sm:$0xf]
                  %422 = vst [vmem:[%s358 + $0x7c] sm:$0xf] %v421
                  %v423 = vld [vmem:[%s357 + $0x100] sm:$0xf]
                  %424 = vst [vmem:[%s358 + $0x80] sm:$0xf] %v423
                  %v425 = vld [vmem:[%s357 + $0x108] sm:$0xf]
                  %426 = vst [vmem:[%s358 + $0x84] sm:$0xf] %v425
                  %v427 = vld [vmem:[%s357 + $0x110] sm:$0xf]
                  %428 = vst [vmem:[%s358 + $0x88] sm:$0xf] %v427
                  %v429 = vld [vmem:[%s357 + $0x118] sm:$0xf]
                  %430 = vst [vmem:[%s358 + $0x8c] sm:$0xf] %v429
                  %v431 = vld [vmem:[%s357 + $0x120] sm:$0xf]
                  %432 = vst [vmem:[%s358 + $0x90] sm:$0xf] %v431
                  %v433 = vld [vmem:[%s357 + $0x128] sm:$0xf]
                  %434 = vst [vmem:[%s358 + $0x94] sm:$0xf] %v433
                  %v435 = vld [vmem:[%s357 + $0x130] sm:$0xf]
                  %436 = vst [vmem:[%s358 + $0x98] sm:$0xf] %v435
                  %v437 = vld [vmem:[%s357 + $0x138] sm:$0xf]
                  %438 = vst [vmem:[%s358 + $0x9c] sm:$0xf] %v437
                  %v439 = vld [vmem:[%s357 + $0x140] sm:$0xf]
                  %440 = vst [vmem:[%s358 + $0xa0] sm:$0xf] %v439
                  %v441 = vld [vmem:[%s357 + $0x148] sm:$0xf]
                  %442 = vst [vmem:[%s358 + $0xa4] sm:$0xf] %v441
                  %v443 = vld [vmem:[%s357 + $0x150] sm:$0xf]
                  %444 = vst [vmem:[%s358 + $0xa8] sm:$0xf] %v443
                  %v445 = vld [vmem:[%s357 + $0x158] sm:$0xf]
                  %446 = vst [vmem:[%s358 + $0xac] sm:$0xf] %v445
                  %v447 = vld [vmem:[%s357 + $0x160] sm:$0xf]
                  %448 = vst [vmem:[%s358 + $0xb0] sm:$0xf] %v447
                  %v449 = vld [vmem:[%s357 + $0x168] sm:$0xf]
                  %450 = vst [vmem:[%s358 + $0xb4] sm:$0xf] %v449
                  %v451 = vld [vmem:[%s357 + $0x170] sm:$0xf]
                  %452 = vst [vmem:[%s358 + $0xb8] sm:$0xf] %v451
                  %v453 = vld [vmem:[%s357 + $0x178] sm:$0xf]
                  %454 = vst [vmem:[%s358 + $0xbc] sm:$0xf] %v453
                  %v455 = vld [vmem:[%s357 + $0x180] sm:$0xf]
                  %456 = vst [vmem:[%s358 + $0xc0] sm:$0xf] %v455
                  %v457 = vld [vmem:[%s357 + $0x188] sm:$0xf]
                  %458 = vst [vmem:[%s358 + $0xc4] sm:$0xf] %v457
                  %v459 = vld [vmem:[%s357 + $0x190] sm:$0xf]
                  %460 = vst [vmem:[%s358 + $0xc8] sm:$0xf] %v459
                  %v461 = vld [vmem:[%s357 + $0x198] sm:$0xf]
                  %462 = vst [vmem:[%s358 + $0xcc] sm:$0xf] %v461
                  %v463 = vld [vmem:[%s357 + $0x1a0] sm:$0xf]
                  %464 = vst [vmem:[%s358 + $0xd0] sm:$0xf] %v463
                  %v465 = vld [vmem:[%s357 + $0x1a8] sm:$0xf]
                  %466 = vst [vmem:[%s358 + $0xd4] sm:$0xf] %v465
                  %v467 = vld [vmem:[%s357 + $0x1b0] sm:$0xf]
                  %468 = vst [vmem:[%s358 + $0xd8] sm:$0xf] %v467
                  %v469 = vld [vmem:[%s357 + $0x1b8] sm:$0xf]
                  %470 = vst [vmem:[%s358 + $0xdc] sm:$0xf] %v469
                  %v471 = vld [vmem:[%s357 + $0x1c0] sm:$0xf]
                  %472 = vst [vmem:[%s358 + $0xe0] sm:$0xf] %v471
                  %v473 = vld [vmem:[%s357 + $0x1c8] sm:$0xf]
                  %474 = vst [vmem:[%s358 + $0xe4] sm:$0xf] %v473
                  %v475 = vld [vmem:[%s357 + $0x1d0] sm:$0xf]
                  %476 = vst [vmem:[%s358 + $0xe8] sm:$0xf] %v475
                  %v477 = vld [vmem:[%s357 + $0x1d8] sm:$0xf]
                  %478 = vst [vmem:[%s358 + $0xec] sm:$0xf] %v477
                  %v479 = vld [vmem:[%s357 + $0x1e0] sm:$0xf]
                  %480 = vst [vmem:[%s358 + $0xf0] sm:$0xf] %v479
                  %v481 = vld [vmem:[%s357 + $0x1e8] sm:$0xf]
                  %482 = vst [vmem:[%s358 + $0xf4] sm:$0xf] %v481
                  %v483 = vld [vmem:[%s357 + $0x1f0] sm:$0xf]
                  %484 = vst [vmem:[%s358 + $0xf8] sm:$0xf] %v483
                  %v485 = vld [vmem:[%s357 + $0x1f8] sm:$0xf]
                  %486 = vst [vmem:[%s358 + $0xfc] sm:$0xf] %v485
                  %v487 = vld [vmem:[%s357 + $0x200] sm:$0xf]
                  %488 = vst [vmem:[%s358 + $0x100] sm:$0xf] %v487
                  %v489 = vld [vmem:[%s357 + $0x208] sm:$0xf]
                  %490 = vst [vmem:[%s358 + $0x104] sm:$0xf] %v489
                  %v491 = vld [vmem:[%s357 + $0x210] sm:$0xf]
                  %492 = vst [vmem:[%s358 + $0x108] sm:$0xf] %v491
                  %v493 = vld [vmem:[%s357 + $0x218] sm:$0xf]
                  %494 = vst [vmem:[%s358 + $0x10c] sm:$0xf] %v493
                  %v495 = vld [vmem:[%s357 + $0x220] sm:$0xf]
                  %496 = vst [vmem:[%s358 + $0x110] sm:$0xf] %v495
                  %v497 = vld [vmem:[%s357 + $0x228] sm:$0xf]
                  %498 = vst [vmem:[%s358 + $0x114] sm:$0xf] %v497
                  %v499 = vld [vmem:[%s357 + $0x230] sm:$0xf]
                  %500 = vst [vmem:[%s358 + $0x118] sm:$0xf] %v499
                  %v501 = vld [vmem:[%s357 + $0x238] sm:$0xf]
                  %502 = vst [vmem:[%s358 + $0x11c] sm:$0xf] %v501
                  %v503 = vld [vmem:[%s357 + $0x240] sm:$0xf]
                  %504 = vst [vmem:[%s358 + $0x120] sm:$0xf] %v503
                  %v505 = vld [vmem:[%s357 + $0x248] sm:$0xf]
                  %506 = vst [vmem:[%s358 + $0x124] sm:$0xf] %v505
                  %v507 = vld [vmem:[%s357 + $0x250] sm:$0xf]
                  %508 = vst [vmem:[%s358 + $0x128] sm:$0xf] %v507
                  %v509 = vld [vmem:[%s357 + $0x258] sm:$0xf]
                  %510 = vst [vmem:[%s358 + $0x12c] sm:$0xf] %v509
                  %v511 = vld [vmem:[%s357 + $0x260] sm:$0xf]
                  %512 = vst [vmem:[%s358 + $0x130] sm:$0xf] %v511
                  %v513 = vld [vmem:[%s357 + $0x268] sm:$0xf]
                  %514 = vst [vmem:[%s358 + $0x134] sm:$0xf] %v513
                  %v515 = vld [vmem:[%s357 + $0x270] sm:$0xf]
                  %516 = vst [vmem:[%s358 + $0x138] sm:$0xf] %v515
                  %v517 = vld [vmem:[%s357 + $0x278] sm:$0xf]
                  %518 = vst [vmem:[%s358 + $0x13c] sm:$0xf] %v517
                $region59: #{_lambda_.5} parent=46 // loop_footer
                  %s356 = sadd.s32 1, %s352
                $region60: #{_lambda_.5} parent=46 // loop_footer_branch
                  %351 = sbr.rel target = $region56
                $region61: #{_lambda_.5} parent=46 // loop_exit
                  _
              $region47: #{_lambda_.5} parent=31 // pred_fallthru
                _
            $region32: #{_lambda_.5} parent=27 // pred_fallthru
              _
            // Predicated region
            $region33: #{_lambda_.5} parent=27 // pred_check
              _
            $region34: #{_lambda_.5} parent=27 // pred_check_branch
              %170 = sbr.rel (0) target = $region36
            $region35: #{_lambda_.5} parent=27 // pred_region
              loop: start=0, step=1, limit=1
              $region37: #{_lambda_.5} parent=35 // loop_pre_header
                _
              $region38: #{_lambda_.5} parent=35 // loop_header
                %s173 = sphi 0, %s177
                %p174 = scmp.ge.s32.totalorder %s173, 1
                %s178 = sphi %s164, %s164
                %s179 = sphi %s162, %s162
              $region39: #{_lambda_.5} parent=35 // loop_header_branch
                %176 = sbr.rel (%p174) target = $region43
              $region40: #{_lambda_.5} parent=35 // loop_body
                %v180 = vld [vmem:[%s178] sm:$0xf]
                %181 = vst [vmem:[%s179] sm:$0xf] %v180
                %v182 = vld [vmem:[%s178 + $0x8] sm:$0xf]
                %183 = vst [vmem:[%s179 + $0x4] sm:$0xf] %v182
                %v184 = vld [vmem:[%s178 + $0x10] sm:$0xf]
                %185 = vst [vmem:[%s179 + $0x8] sm:$0xf] %v184
                %v186 = vld [vmem:[%s178 + $0x18] sm:$0xf]
                %187 = vst [vmem:[%s179 + $0xc] sm:$0xf] %v186
                %v188 = vld [vmem:[%s178 + $0x20] sm:$0xf]
                %189 = vst [vmem:[%s179 + $0x10] sm:$0xf] %v188
                %v190 = vld [vmem:[%s178 + $0x28] sm:$0xf]
                %191 = vst [vmem:[%s179 + $0x14] sm:$0xf] %v190
                %v192 = vld [vmem:[%s178 + $0x30] sm:$0xf]
                %193 = vst [vmem:[%s179 + $0x18] sm:$0xf] %v192
                %v194 = vld [vmem:[%s178 + $0x38] sm:$0xf]
                %195 = vst [vmem:[%s179 + $0x1c] sm:$0xf] %v194
                %v196 = vld [vmem:[%s178 + $0x40] sm:$0xf]
                %197 = vst [vmem:[%s179 + $0x20] sm:$0xf] %v196
                %v198 = vld [vmem:[%s178 + $0x48] sm:$0xf]
                %199 = vst [vmem:[%s179 + $0x24] sm:$0xf] %v198
                %v200 = vld [vmem:[%s178 + $0x50] sm:$0xf]
                %201 = vst [vmem:[%s179 + $0x28] sm:$0xf] %v200
                %v202 = vld [vmem:[%s178 + $0x58] sm:$0xf]
                %203 = vst [vmem:[%s179 + $0x2c] sm:$0xf] %v202
                %v204 = vld [vmem:[%s178 + $0x60] sm:$0xf]
                %205 = vst [vmem:[%s179 + $0x30] sm:$0xf] %v204
                %v206 = vld [vmem:[%s178 + $0x68] sm:$0xf]
                %207 = vst [vmem:[%s179 + $0x34] sm:$0xf] %v206
                %v208 = vld [vmem:[%s178 + $0x70] sm:$0xf]
                %209 = vst [vmem:[%s179 + $0x38] sm:$0xf] %v208
                %v210 = vld [vmem:[%s178 + $0x78] sm:$0xf]
                %211 = vst [vmem:[%s179 + $0x3c] sm:$0xf] %v210
                %v212 = vld [vmem:[%s178 + $0x80] sm:$0xf]
                %213 = vst [vmem:[%s179 + $0x40] sm:$0xf] %v212
                %v214 = vld [vmem:[%s178 + $0x88] sm:$0xf]
                %215 = vst [vmem:[%s179 + $0x44] sm:$0xf] %v214
                %v216 = vld [vmem:[%s178 + $0x90] sm:$0xf]
                %217 = vst [vmem:[%s179 + $0x48] sm:$0xf] %v216
                %v218 = vld [vmem:[%s178 + $0x98] sm:$0xf]
                %219 = vst [vmem:[%s179 + $0x4c] sm:$0xf] %v218
                %v220 = vld [vmem:[%s178 + $0xa0] sm:$0xf]
                %221 = vst [vmem:[%s179 + $0x50] sm:$0xf] %v220
                %v222 = vld [vmem:[%s178 + $0xa8] sm:$0xf]
                %223 = vst [vmem:[%s179 + $0x54] sm:$0xf] %v222
                %v224 = vld [vmem:[%s178 + $0xb0] sm:$0xf]
                %225 = vst [vmem:[%s179 + $0x58] sm:$0xf] %v224
                %v226 = vld [vmem:[%s178 + $0xb8] sm:$0xf]
                %227 = vst [vmem:[%s179 + $0x5c] sm:$0xf] %v226
                %v228 = vld [vmem:[%s178 + $0xc0] sm:$0xf]
                %229 = vst [vmem:[%s179 + $0x60] sm:$0xf] %v228
                %v230 = vld [vmem:[%s178 + $0xc8] sm:$0xf]
                %231 = vst [vmem:[%s179 + $0x64] sm:$0xf] %v230
                %v232 = vld [vmem:[%s178 + $0xd0] sm:$0xf]
                %233 = vst [vmem:[%s179 + $0x68] sm:$0xf] %v232
                %v234 = vld [vmem:[%s178 + $0xd8] sm:$0xf]
                %235 = vst [vmem:[%s179 + $0x6c] sm:$0xf] %v234
                %v236 = vld [vmem:[%s178 + $0xe0] sm:$0xf]
                %237 = vst [vmem:[%s179 + $0x70] sm:$0xf] %v236
                %v238 = vld [vmem:[%s178 + $0xe8] sm:$0xf]
                %239 = vst [vmem:[%s179 + $0x74] sm:$0xf] %v238
                %v240 = vld [vmem:[%s178 + $0xf0] sm:$0xf]
                %241 = vst [vmem:[%s179 + $0x78] sm:$0xf] %v240
                %v242 = vld [vmem:[%s178 + $0xf8] sm:$0xf]
                %243 = vst [vmem:[%s179 + $0x7c] sm:$0xf] %v242
                %v244 = vld [vmem:[%s178 + $0x100] sm:$0xf]
                %245 = vst [vmem:[%s179 + $0x80] sm:$0xf] %v244
                %v246 = vld [vmem:[%s178 + $0x108] sm:$0xf]
                %247 = vst [vmem:[%s179 + $0x84] sm:$0xf] %v246
                %v248 = vld [vmem:[%s178 + $0x110] sm:$0xf]
                %249 = vst [vmem:[%s179 + $0x88] sm:$0xf] %v248
                %v250 = vld [vmem:[%s178 + $0x118] sm:$0xf]
                %251 = vst [vmem:[%s179 + $0x8c] sm:$0xf] %v250
                %v252 = vld [vmem:[%s178 + $0x120] sm:$0xf]
                %253 = vst [vmem:[%s179 + $0x90] sm:$0xf] %v252
                %v254 = vld [vmem:[%s178 + $0x128] sm:$0xf]
                %255 = vst [vmem:[%s179 + $0x94] sm:$0xf] %v254
                %v256 = vld [vmem:[%s178 + $0x130] sm:$0xf]
                %257 = vst [vmem:[%s179 + $0x98] sm:$0xf] %v256
                %v258 = vld [vmem:[%s178 + $0x138] sm:$0xf]
                %259 = vst [vmem:[%s179 + $0x9c] sm:$0xf] %v258
                %v260 = vld [vmem:[%s178 + $0x140] sm:$0xf]
                %261 = vst [vmem:[%s179 + $0xa0] sm:$0xf] %v260
                %v262 = vld [vmem:[%s178 + $0x148] sm:$0xf]
                %263 = vst [vmem:[%s179 + $0xa4] sm:$0xf] %v262
                %v264 = vld [vmem:[%s178 + $0x150] sm:$0xf]
                %265 = vst [vmem:[%s179 + $0xa8] sm:$0xf] %v264
                %v266 = vld [vmem:[%s178 + $0x158] sm:$0xf]
                %267 = vst [vmem:[%s179 + $0xac] sm:$0xf] %v266
                %v268 = vld [vmem:[%s178 + $0x160] sm:$0xf]
                %269 = vst [vmem:[%s179 + $0xb0] sm:$0xf] %v268
                %v270 = vld [vmem:[%s178 + $0x168] sm:$0xf]
                %271 = vst [vmem:[%s179 + $0xb4] sm:$0xf] %v270
                %v272 = vld [vmem:[%s178 + $0x170] sm:$0xf]
                %273 = vst [vmem:[%s179 + $0xb8] sm:$0xf] %v272
                %v274 = vld [vmem:[%s178 + $0x178] sm:$0xf]
                %275 = vst [vmem:[%s179 + $0xbc] sm:$0xf] %v274
                %v276 = vld [vmem:[%s178 + $0x180] sm:$0xf]
                %277 = vst [vmem:[%s179 + $0xc0] sm:$0xf] %v276
                %v278 = vld [vmem:[%s178 + $0x188] sm:$0xf]
                %279 = vst [vmem:[%s179 + $0xc4] sm:$0xf] %v278
                %v280 = vld [vmem:[%s178 + $0x190] sm:$0xf]
                %281 = vst [vmem:[%s179 + $0xc8] sm:$0xf] %v280
                %v282 = vld [vmem:[%s178 + $0x198] sm:$0xf]
                %283 = vst [vmem:[%s179 + $0xcc] sm:$0xf] %v282
                %v284 = vld [vmem:[%s178 + $0x1a0] sm:$0xf]
                %285 = vst [vmem:[%s179 + $0xd0] sm:$0xf] %v284
                %v286 = vld [vmem:[%s178 + $0x1a8] sm:$0xf]
                %287 = vst [vmem:[%s179 + $0xd4] sm:$0xf] %v286
                %v288 = vld [vmem:[%s178 + $0x1b0] sm:$0xf]
                %289 = vst [vmem:[%s179 + $0xd8] sm:$0xf] %v288
                %v290 = vld [vmem:[%s178 + $0x1b8] sm:$0xf]
                %291 = vst [vmem:[%s179 + $0xdc] sm:$0xf] %v290
                %v292 = vld [vmem:[%s178 + $0x1c0] sm:$0xf]
                %293 = vst [vmem:[%s179 + $0xe0] sm:$0xf] %v292
                %v294 = vld [vmem:[%s178 + $0x1c8] sm:$0xf]
                %295 = vst [vmem:[%s179 + $0xe4] sm:$0xf] %v294
                %v296 = vld [vmem:[%s178 + $0x1d0] sm:$0xf]
                %297 = vst [vmem:[%s179 + $0xe8] sm:$0xf] %v296
                %v298 = vld [vmem:[%s178 + $0x1d8] sm:$0xf]
                %299 = vst [vmem:[%s179 + $0xec] sm:$0xf] %v298
                %v300 = vld [vmem:[%s178 + $0x1e0] sm:$0xf]
                %301 = vst [vmem:[%s179 + $0xf0] sm:$0xf] %v300
                %v302 = vld [vmem:[%s178 + $0x1e8] sm:$0xf]
                %303 = vst [vmem:[%s179 + $0xf4] sm:$0xf] %v302
                %v304 = vld [vmem:[%s178 + $0x1f0] sm:$0xf]
                %305 = vst [vmem:[%s179 + $0xf8] sm:$0xf] %v304
                %v306 = vld [vmem:[%s178 + $0x1f8] sm:$0xf]
                %307 = vst [vmem:[%s179 + $0xfc] sm:$0xf] %v306
                %v308 = vld [vmem:[%s178 + $0x200] sm:$0xf]
                %309 = vst [vmem:[%s179 + $0x100] sm:$0xf] %v308
                %v310 = vld [vmem:[%s178 + $0x208] sm:$0xf]
                %311 = vst [vmem:[%s179 + $0x104] sm:$0xf] %v310
                %v312 = vld [vmem:[%s178 + $0x210] sm:$0xf]
                %313 = vst [vmem:[%s179 + $0x108] sm:$0xf] %v312
                %v314 = vld [vmem:[%s178 + $0x218] sm:$0xf]
                %315 = vst [vmem:[%s179 + $0x10c] sm:$0xf] %v314
                %v316 = vld [vmem:[%s178 + $0x220] sm:$0xf]
                %317 = vst [vmem:[%s179 + $0x110] sm:$0xf] %v316
                %v318 = vld [vmem:[%s178 + $0x228] sm:$0xf]
                %319 = vst [vmem:[%s179 + $0x114] sm:$0xf] %v318
                %v320 = vld [vmem:[%s178 + $0x230] sm:$0xf]
                %321 = vst [vmem:[%s179 + $0x118] sm:$0xf] %v320
                %v322 = vld [vmem:[%s178 + $0x238] sm:$0xf]
                %323 = vst [vmem:[%s179 + $0x11c] sm:$0xf] %v322
                %v324 = vld [vmem:[%s178 + $0x240] sm:$0xf]
                %325 = vst [vmem:[%s179 + $0x120] sm:$0xf] %v324
                %v326 = vld [vmem:[%s178 + $0x248] sm:$0xf]
                %327 = vst [vmem:[%s179 + $0x124] sm:$0xf] %v326
                %v328 = vld [vmem:[%s178 + $0x250] sm:$0xf]
                %329 = vst [vmem:[%s179 + $0x128] sm:$0xf] %v328
                %v330 = vld [vmem:[%s178 + $0x258] sm:$0xf]
                %331 = vst [vmem:[%s179 + $0x12c] sm:$0xf] %v330
                %v332 = vld [vmem:[%s178 + $0x260] sm:$0xf]
                %333 = vst [vmem:[%s179 + $0x130] sm:$0xf] %v332
                %v334 = vld [vmem:[%s178 + $0x268] sm:$0xf]
                %335 = vst [vmem:[%s179 + $0x134] sm:$0xf] %v334
                %v336 = vld [vmem:[%s178 + $0x270] sm:$0xf]
                %337 = vst [vmem:[%s179 + $0x138] sm:$0xf] %v336
                %v338 = vld [vmem:[%s178 + $0x278] sm:$0xf]
                %339 = vst [vmem:[%s179 + $0x13c] sm:$0xf] %v338
              $region41: #{_lambda_.5} parent=35 // loop_footer
                %s177 = sadd.s32 1, %s173
              $region42: #{_lambda_.5} parent=35 // loop_footer_branch
                %172 = sbr.rel target = $region38
              $region43: #{_lambda_.5} parent=35 // loop_exit
                _
            $region36: #{_lambda_.5} parent=27 // pred_fallthru
              _
          $region28: #{_lambda_.5} parent=23 // pred_fallthru
            _
          %519 = vnop
        $region24: #{_lambda_.5} parent=19 // pred_fallthru
          _
        // Predicated region
        $region62: #{_lambda_.5} parent=19 // pred_check
          %p520 = pneg %p93
        $region63: #{_lambda_.5} parent=19 // pred_check_branch
          %522 = sbr.rel (%p520) target = $region65
        $region64: #{_lambda_.5} parent=19 // pred_region
          %p523 = scmp.lt.s32.totalorder %s17, 1
          %s524 = scalar_select %p523, %s17, 1
          %s525 = scalar_lea.vmem %s2, %s524
        $region65: #{_lambda_.5} parent=19 // pred_fallthru
          _
      $region20: #{_lambda_.5} parent=5 // pred_fallthru
        _
      %p526 = scmp.le.s32.totalorder 1, %s9
      %p527 = scmp.lt.s32.totalorder %s9, 3
      %p528 = pnand %p526, %p527
      %p529 = pneg %p528
      // Predicated region
      $region66: #{_lambda_.5} parent=5 // pred_check
        _
      $region67: #{_lambda_.5} parent=5 // pred_check_branch
        %531 = sbr.rel (%p528) target = $region69
      $region68: #{_lambda_.5} parent=5 // pred_region
        %s532 = ssub.s32 %s9, 1
        %s533 = sand.u32 %s60, 1
        %s534 = sand.u32 %s60, 1
        %s535 = smul.addr %s534, 320
        %s536 = scalar_lea.vmem [#allocation2], %s535
        // Predicated region
        $region70: #{_lambda_.5} parent=68 // pred_check
          %p537 = pneg %p73
        $region71: #{_lambda_.5} parent=68 // pred_check_branch
          %539 = sbr.rel (%p537) target = $region73
        $region72: #{_lambda_.5} parent=68 // pred_region
          _
        $region73: #{_lambda_.5} parent=68 // pred_fallthru
          _
        %s540 = smul.u32 16, %s18
        %p541 = scmp.lt.s32.totalorder %s540, 15
        %s542 = scalar_select %p541, %s540, 15
        %s543 = smul.addr %s542, 5
        %s544 = smul.addr %s543, 4
        %s545 = scalar_lea.vmem %s0, %s544
        %p546 = pneg %p47
        %p547 = pneg %p44
        %s548 = sand.u32 %s60, 1
        %s549 = sand.u32 %s60, 1
        %s550 = smul.addr %s549, 320
        %s551 = scalar_lea.vmem [#allocation2], %s550
        %p552 = pneg %p73
        %p553 = pneg %p70
        %p554 = scmp.lt.s32.totalorder %s19, 1
        %s555 = scalar_select %p554, %s19, 1
        %s556 = scalar_lea.vmem %s2, %s555
        %p557 = pneg %p99
        %p558 = pneg %p96
        %p559 = pneg %p127
        %p560 = pneg %p124
        %s561 = sand.u32 %s114, 1
        %s562 = sand.u32 %s114, 1
        %s563 = smul.addr %s562, 64
        %s564 = scalar_lea.vmem [#allocation3], %s563
        %s565 = smul.u32 16, %s18
        %p566 = scmp.lt.s32.totalorder %s565, 15
        %s567 = scalar_select %p566, %s565, 15
        %s568 = smul.addr %s567, 5
        %s569 = smul.addr %s568, 4
        %s570 = scalar_lea.vmem %s0, %s569
        %s571 = smul.u32 16, %s18
        %p572 = scmp.lt.s32.totalorder %s19, 1
        %s573 = scalar_select %p572, %s19, 1
        %s574 = scalar_lea.vmem %s2, %s573
        %s575 = smul.u32 16, %s18
        %v577 = vld [vmem:[%s570] sm:$0xff]
        %v578 = vld [vmem:[%s570 + $0x8] sm:$0xff]
        %v579 = vld [vmem:[%s570 + $0x10] sm:$0xf]
        %v580 = vld [vmem:[%s570 + $0x14] sm:$0xff]
        %v581 = vld [vmem:[%s570 + $0x1c] sm:$0xff]
        %v582 = vld [vmem:[%s570 + $0x24] sm:$0xf]
        %v583 = vld [vmem:[%s570 + $0x28] sm:$0xff]
        %v584 = vld [vmem:[%s570 + $0x30] sm:$0xff]
        %v585 = vld [vmem:[%s570 + $0x38] sm:$0xf]
        %v586 = vld [vmem:[%s570 + $0x3c] sm:$0xff]
        %v587 = vld [vmem:[%s570 + $0x44] sm:$0xff]
        %v588 = vld [vmem:[%s570 + $0x4c] sm:$0xf]
        %v589 = vld [vmem:[%s570 + $0x50] sm:$0xff]
        %v590 = vld [vmem:[%s570 + $0x58] sm:$0xff]
        %v591 = vld [vmem:[%s570 + $0x60] sm:$0xf]
        %v592 = vld [vmem:[%s570 + $0x64] sm:$0xff]
        %v593 = vld [vmem:[%s570 + $0x6c] sm:$0xff]
        %v594 = vld [vmem:[%s570 + $0x74] sm:$0xf]
        %v595 = vld [vmem:[%s570 + $0x78] sm:$0xff]
        %v596 = vld [vmem:[%s570 + $0x80] sm:$0xff]
        %v597 = vld [vmem:[%s570 + $0x88] sm:$0xf]
        %v598 = vld [vmem:[%s570 + $0x8c] sm:$0xff]
        %v599 = vld [vmem:[%s570 + $0x94] sm:$0xff]
        %v600 = vld [vmem:[%s570 + $0x9c] sm:$0xf]
        %v601 = vld [vmem:[%s570 + $0xa0] sm:$0xff]
        %v602 = vld [vmem:[%s570 + $0xa8] sm:$0xff]
        %v603 = vld [vmem:[%s570 + $0xb0] sm:$0xf]
        %v604 = vld [vmem:[%s570 + $0xb4] sm:$0xff]
        %v605 = vld [vmem:[%s570 + $0xbc] sm:$0xff]
        %v606 = vld [vmem:[%s570 + $0xc4] sm:$0xf]
        %v607 = vld [vmem:[%s570 + $0xc8] sm:$0xff]
        %v608 = vld [vmem:[%s570 + $0xd0] sm:$0xff]
        %v609 = vld [vmem:[%s570 + $0xd8] sm:$0xf]
        %v610 = vld [vmem:[%s570 + $0xdc] sm:$0xff]
        %v611 = vld [vmem:[%s570 + $0xe4] sm:$0xff]
        %v612 = vld [vmem:[%s570 + $0xec] sm:$0xf]
        %v613 = vld [vmem:[%s570 + $0xf0] sm:$0xff]
        %v614 = vld [vmem:[%s570 + $0xf8] sm:$0xff]
        %v615 = vld [vmem:[%s570 + $0x100] sm:$0xf]
        %v616 = vld [vmem:[%s570 + $0x104] sm:$0xff]
        %v617 = vld [vmem:[%s570 + $0x10c] sm:$0xff]
        %v618 = vld [vmem:[%s570 + $0x114] sm:$0xf]
        %v619 = vld [vmem:[%s570 + $0x118] sm:$0xff]
        %v620 = vld [vmem:[%s570 + $0x120] sm:$0xff]
        %v621 = vld [vmem:[%s570 + $0x128] sm:$0xf]
        %v622 = vld [vmem:[%s570 + $0x12c] sm:$0xff]
        %v623 = vld [vmem:[%s570 + $0x134] sm:$0xff]
        %v624 = vld [vmem:[%s570 + $0x13c] sm:$0xf]
        %v625 = vld [vmem:[%s536] sm:$0xf]
        %v626 = vld [vmem:[%s536 + $0x4] sm:$0xf]
        %v627 = vld [vmem:[%s536 + $0x8] sm:$0xf]
        %v628 = vld [vmem:[%s536 + $0xc] sm:$0xf]
        %v629 = vld [vmem:[%s536 + $0x10] sm:$0xf]
        %v630 = vld [vmem:[%s536 + $0x14] sm:$0xf]
        %v631 = vld [vmem:[%s536 + $0x18] sm:$0xf]
        %v632 = vld [vmem:[%s536 + $0x1c] sm:$0xf]
        %v633 = vld [vmem:[%s536 + $0x20] sm:$0xf]
        %v634 = vld [vmem:[%s536 + $0x24] sm:$0xf]
        %v635 = vld [vmem:[%s536 + $0x28] sm:$0xf]
        %v636 = vld [vmem:[%s536 + $0x2c] sm:$0xf]
        %v637 = vld [vmem:[%s536 + $0x30] sm:$0xf]
        %v638 = vld [vmem:[%s536 + $0x34] sm:$0xf]
        %v639 = vld [vmem:[%s536 + $0x38] sm:$0xf]
        %v640 = vld [vmem:[%s536 + $0x3c] sm:$0xf]
        %v641 = vld [vmem:[%s536 + $0x40] sm:$0xf]
        %v642 = vld [vmem:[%s536 + $0x44] sm:$0xf]
        %v643 = vld [vmem:[%s536 + $0x48] sm:$0xf]
        %v644 = vld [vmem:[%s536 + $0x4c] sm:$0xf]
        %v645 = vld [vmem:[%s536 + $0x50] sm:$0xf]
        %v646 = vld [vmem:[%s536 + $0x54] sm:$0xf]
        %v647 = vld [vmem:[%s536 + $0x58] sm:$0xf]
        %v648 = vld [vmem:[%s536 + $0x5c] sm:$0xf]
        %v649 = vld [vmem:[%s536 + $0x60] sm:$0xf]
        %v650 = vld [vmem:[%s536 + $0x64] sm:$0xf]
        %v651 = vld [vmem:[%s536 + $0x68] sm:$0xf]
        %v652 = vld [vmem:[%s536 + $0x6c] sm:$0xf]
        %v653 = vld [vmem:[%s536 + $0x70] sm:$0xf]
        %v654 = vld [vmem:[%s536 + $0x74] sm:$0xf]
        %v655 = vld [vmem:[%s536 + $0x78] sm:$0xf]
        %v656 = vld [vmem:[%s536 + $0x7c] sm:$0xf]
        %v657 = vld [vmem:[%s536 + $0x80] sm:$0xf]
        %v658 = vld [vmem:[%s536 + $0x84] sm:$0xf]
        %v659 = vld [vmem:[%s536 + $0x88] sm:$0xf]
        %v660 = vld [vmem:[%s536 + $0x8c] sm:$0xf]
        %v661 = vld [vmem:[%s536 + $0x90] sm:$0xf]
        %v662 = vld [vmem:[%s536 + $0x94] sm:$0xf]
        %v663 = vld [vmem:[%s536 + $0x98] sm:$0xf]
        %v664 = vld [vmem:[%s536 + $0x9c] sm:$0xf]
        %v665 = vld [vmem:[%s536 + $0xa0] sm:$0xf]
        %v666 = vld [vmem:[%s536 + $0xa4] sm:$0xf]
        %v667 = vld [vmem:[%s536 + $0xa8] sm:$0xf]
        %v668 = vld [vmem:[%s536 + $0xac] sm:$0xf]
        %v669 = vld [vmem:[%s536 + $0xb0] sm:$0xf]
        %v670 = vld [vmem:[%s536 + $0xb4] sm:$0xf]
        %v671 = vld [vmem:[%s536 + $0xb8] sm:$0xf]
        %v672 = vld [vmem:[%s536 + $0xbc] sm:$0xf]
        %v673 = vld [vmem:[%s536 + $0xc0] sm:$0xf]
        %v674 = vld [vmem:[%s536 + $0xc4] sm:$0xf]
        %v675 = vld [vmem:[%s536 + $0xc8] sm:$0xf]
        %v676 = vld [vmem:[%s536 + $0xcc] sm:$0xf]
        %v677 = vld [vmem:[%s536 + $0xd0] sm:$0xf]
        %v678 = vld [vmem:[%s536 + $0xd4] sm:$0xf]
        %v679 = vld [vmem:[%s536 + $0xd8] sm:$0xf]
        %v680 = vld [vmem:[%s536 + $0xdc] sm:$0xf]
        %v681 = vld [vmem:[%s536 + $0xe0] sm:$0xf]
        %v682 = vld [vmem:[%s536 + $0xe4] sm:$0xf]
        %v683 = vld [vmem:[%s536 + $0xe8] sm:$0xf]
        %v684 = vld [vmem:[%s536 + $0xec] sm:$0xf]
        %v685 = vld [vmem:[%s536 + $0xf0] sm:$0xf]
        %v686 = vld [vmem:[%s536 + $0xf4] sm:$0xf]
        %v687 = vld [vmem:[%s536 + $0xf8] sm:$0xf]
        %v688 = vld [vmem:[%s536 + $0xfc] sm:$0xf]
        %v689 = vld [vmem:[%s536 + $0x100] sm:$0xf]
        %v690 = vld [vmem:[%s536 + $0x104] sm:$0xf]
        %v691 = vld [vmem:[%s536 + $0x108] sm:$0xf]
        %v692 = vld [vmem:[%s536 + $0x10c] sm:$0xf]
        %v693 = vld [vmem:[%s536 + $0x110] sm:$0xf]
        %v694 = vld [vmem:[%s536 + $0x114] sm:$0xf]
        %v695 = vld [vmem:[%s536 + $0x118] sm:$0xf]
        %v696 = vld [vmem:[%s536 + $0x11c] sm:$0xf]
        %v697 = vld [vmem:[%s536 + $0x120] sm:$0xf]
        %v698 = vld [vmem:[%s536 + $0x124] sm:$0xf]
        %v699 = vld [vmem:[%s536 + $0x128] sm:$0xf]
        %v700 = vld [vmem:[%s536 + $0x12c] sm:$0xf]
        %v701 = vld [vmem:[%s536 + $0x130] sm:$0xf]
        %v702 = vld [vmem:[%s536 + $0x134] sm:$0xf]
        %v703 = vld [vmem:[%s536 + $0x138] sm:$0xf]
        %v704 = vld [vmem:[%s536 + $0x13c] sm:$0xf]
        %v705 = vld [vmem:[%s574] sm:$0x1]
        %v707 = vlaneseq
        %v708 = vshrl.u32 %v707, 7
        %v709 = vsub.s32 0, %v708
        %v710 = vrot.slane %v705, %v709
        %v760 = vunpack.c.l.b16 %v577
        %v761 = vunpack.c.h.b16 %v577
        %v762 = vunpack.c.l.b16 %v578
        %v763 = vunpack.c.h.b16 %v578
        %v764 = vunpack.c.l.b16 %v579
        %v765 = vunpack.c.l.b16 %v580
        %v766 = vunpack.c.h.b16 %v580
        %v767 = vunpack.c.l.b16 %v581
        %v768 = vunpack.c.h.b16 %v581
        %v769 = vunpack.c.l.b16 %v582
        %v770 = vunpack.c.l.b16 %v583
        %v771 = vunpack.c.h.b16 %v583
        %v772 = vunpack.c.l.b16 %v584
        %v773 = vunpack.c.h.b16 %v584
        %v774 = vunpack.c.l.b16 %v585
        %v775 = vunpack.c.l.b16 %v586
        %v776 = vunpack.c.h.b16 %v586
        %v777 = vunpack.c.l.b16 %v587
        %v778 = vunpack.c.h.b16 %v587
        %v779 = vunpack.c.l.b16 %v588
        %v780 = vunpack.c.l.b16 %v589
        %v781 = vunpack.c.h.b16 %v589
        %v782 = vunpack.c.l.b16 %v590
        %v783 = vunpack.c.h.b16 %v590
        %v784 = vunpack.c.l.b16 %v591
        %v785 = vunpack.c.l.b16 %v592
        %v786 = vunpack.c.h.b16 %v592
        %v787 = vunpack.c.l.b16 %v593
        %v788 = vunpack.c.h.b16 %v593
        %v789 = vunpack.c.l.b16 %v594
        %v790 = vunpack.c.l.b16 %v595
        %v791 = vunpack.c.h.b16 %v595
        %v792 = vunpack.c.l.b16 %v596
        %v793 = vunpack.c.h.b16 %v596
        %v794 = vunpack.c.l.b16 %v597
        %v795 = vunpack.c.l.b16 %v598
        %v796 = vunpack.c.h.b16 %v598
        %v797 = vunpack.c.l.b16 %v599
        %v798 = vunpack.c.h.b16 %v599
        %v799 = vunpack.c.l.b16 %v600
        %v800 = vunpack.c.l.b16 %v601
        %v801 = vunpack.c.h.b16 %v601
        %v802 = vunpack.c.l.b16 %v602
        %v803 = vunpack.c.h.b16 %v602
        %v804 = vunpack.c.l.b16 %v603
        %v805 = vunpack.c.l.b16 %v604
        %v806 = vunpack.c.h.b16 %v604
        %v807 = vunpack.c.l.b16 %v605
        %v808 = vunpack.c.h.b16 %v605
        %v809 = vunpack.c.l.b16 %v606
        %v810 = vunpack.c.l.b16 %v607
        %v811 = vunpack.c.h.b16 %v607
        %v812 = vunpack.c.l.b16 %v608
        %v813 = vunpack.c.h.b16 %v608
        %v814 = vunpack.c.l.b16 %v609
        %v815 = vunpack.c.l.b16 %v610
        %v816 = vunpack.c.h.b16 %v610
        %v817 = vunpack.c.l.b16 %v611
        %v818 = vunpack.c.h.b16 %v611
        %v819 = vunpack.c.l.b16 %v612
        %v820 = vunpack.c.l.b16 %v613
        %v821 = vunpack.c.h.b16 %v613
        %v822 = vunpack.c.l.b16 %v614
        %v823 = vunpack.c.h.b16 %v614
        %v824 = vunpack.c.l.b16 %v615
        %v825 = vunpack.c.l.b16 %v616
        %v826 = vunpack.c.h.b16 %v616
        %v827 = vunpack.c.l.b16 %v617
        %v828 = vunpack.c.h.b16 %v617
        %v829 = vunpack.c.l.b16 %v618
        %v830 = vunpack.c.l.b16 %v619
        %v831 = vunpack.c.h.b16 %v619
        %v832 = vunpack.c.l.b16 %v620
        %v833 = vunpack.c.h.b16 %v620
        %v834 = vunpack.c.l.b16 %v621
        %v835 = vunpack.c.l.b16 %v622
        %v836 = vunpack.c.h.b16 %v622
        %v837 = vunpack.c.l.b16 %v623
        %v838 = vunpack.c.h.b16 %v623
        %v839 = vunpack.c.l.b16 %v624
        %v840 = vpack.c.b16 %v765, %v760
        %v841 = vpack.c.b16 %v766, %v761
        %v842 = vpack.c.b16 %v767, %v762
        %v843 = vpack.c.b16 %v768, %v763
        %v844 = vpack.c.b16 %v769, %v764
        %v845 = vpack.c.b16 %v775, %v770
        %v846 = vpack.c.b16 %v776, %v771
        %v847 = vpack.c.b16 %v777, %v772
        %v848 = vpack.c.b16 %v778, %v773
        %v849 = vpack.c.b16 %v779, %v774
        %v850 = vpack.c.b16 %v785, %v780
        %v851 = vpack.c.b16 %v786, %v781
        %v852 = vpack.c.b16 %v787, %v782
        %v853 = vpack.c.b16 %v788, %v783
        %v854 = vpack.c.b16 %v789, %v784
        %v855 = vpack.c.b16 %v795, %v790
        %v856 = vpack.c.b16 %v796, %v791
        %v857 = vpack.c.b16 %v797, %v792
        %v858 = vpack.c.b16 %v798, %v793
        %v859 = vpack.c.b16 %v799, %v794
        %v860 = vpack.c.b16 %v805, %v800
        %v861 = vpack.c.b16 %v806, %v801
        %v862 = vpack.c.b16 %v807, %v802
        %v863 = vpack.c.b16 %v808, %v803
        %v864 = vpack.c.b16 %v809, %v804
        %v865 = vpack.c.b16 %v815, %v810
        %v866 = vpack.c.b16 %v816, %v811
        %v867 = vpack.c.b16 %v817, %v812
        %v868 = vpack.c.b16 %v818, %v813
        %v869 = vpack.c.b16 %v819, %v814
        %v870 = vpack.c.b16 %v825, %v820
        %v871 = vpack.c.b16 %v826, %v821
        %v872 = vpack.c.b16 %v827, %v822
        %v873 = vpack.c.b16 %v828, %v823
        %v874 = vpack.c.b16 %v829, %v824
        %v875 = vpack.c.b16 %v835, %v830
        %v876 = vpack.c.b16 %v836, %v831
        %v877 = vpack.c.b16 %v837, %v832
        %v878 = vpack.c.b16 %v838, %v833
        %v879 = vpack.c.b16 %v839, %v834
        %v1000 = vunpack.c.l.b16 %v625
        %v1001 = vunpack.c.l.b16 %v626
        %v1002 = vunpack.c.l.b16 %v627
        %v1003 = vunpack.c.l.b16 %v628
        %v1004 = vunpack.c.l.b16 %v629
        %v1005 = vunpack.c.l.b16 %v630
        %v1006 = vunpack.c.l.b16 %v631
        %v1007 = vunpack.c.l.b16 %v632
        %v1008 = vunpack.c.l.b16 %v633
        %v1009 = vunpack.c.l.b16 %v634
        %v1010 = vunpack.c.l.b16 %v635
        %v1011 = vunpack.c.l.b16 %v636
        %v1012 = vunpack.c.l.b16 %v637
        %v1013 = vunpack.c.l.b16 %v638
        %v1014 = vunpack.c.l.b16 %v639
        %v1015 = vunpack.c.l.b16 %v640
        %v1016 = vunpack.c.l.b16 %v641
        %v1017 = vunpack.c.l.b16 %v642
        %v1018 = vunpack.c.l.b16 %v643
        %v1019 = vunpack.c.l.b16 %v644
        %v1020 = vunpack.c.l.b16 %v645
        %v1021 = vunpack.c.l.b16 %v646
        %v1022 = vunpack.c.l.b16 %v647
        %v1023 = vunpack.c.l.b16 %v648
        %v1024 = vunpack.c.l.b16 %v649
        %v1025 = vunpack.c.l.b16 %v650
        %v1026 = vunpack.c.l.b16 %v651
        %v1027 = vunpack.c.l.b16 %v652
        %v1028 = vunpack.c.l.b16 %v653
        %v1029 = vunpack.c.l.b16 %v654
        %v1030 = vunpack.c.l.b16 %v655
        %v1031 = vunpack.c.l.b16 %v656
        %v1032 = vunpack.c.l.b16 %v657
        %v1033 = vunpack.c.l.b16 %v658
        %v1034 = vunpack.c.l.b16 %v659
        %v1035 = vunpack.c.l.b16 %v660
        %v1036 = vunpack.c.l.b16 %v661
        %v1037 = vunpack.c.l.b16 %v662
        %v1038 = vunpack.c.l.b16 %v663
        %v1039 = vunpack.c.l.b16 %v664
        %v1040 = vunpack.c.l.b16 %v665
        %v1041 = vunpack.c.l.b16 %v666
        %v1042 = vunpack.c.l.b16 %v667
        %v1043 = vunpack.c.l.b16 %v668
        %v1044 = vunpack.c.l.b16 %v669
        %v1045 = vunpack.c.l.b16 %v670
        %v1046 = vunpack.c.l.b16 %v671
        %v1047 = vunpack.c.l.b16 %v672
        %v1048 = vunpack.c.l.b16 %v673
        %v1049 = vunpack.c.l.b16 %v674
        %v1050 = vunpack.c.l.b16 %v675
        %v1051 = vunpack.c.l.b16 %v676
        %v1052 = vunpack.c.l.b16 %v677
        %v1053 = vunpack.c.l.b16 %v678
        %v1054 = vunpack.c.l.b16 %v679
        %v1055 = vunpack.c.l.b16 %v680
        %v1056 = vunpack.c.l.b16 %v681
        %v1057 = vunpack.c.l.b16 %v682
        %v1058 = vunpack.c.l.b16 %v683
        %v1059 = vunpack.c.l.b16 %v684
        %v1060 = vunpack.c.l.b16 %v685
        %v1061 = vunpack.c.l.b16 %v686
        %v1062 = vunpack.c.l.b16 %v687
        %v1063 = vunpack.c.l.b16 %v688
        %v1064 = vunpack.c.l.b16 %v689
        %v1065 = vunpack.c.l.b16 %v690
        %v1066 = vunpack.c.l.b16 %v691
        %v1067 = vunpack.c.l.b16 %v692
        %v1068 = vunpack.c.l.b16 %v693
        %v1069 = vunpack.c.l.b16 %v694
        %v1070 = vunpack.c.l.b16 %v695
        %v1071 = vunpack.c.l.b16 %v696
        %v1072 = vunpack.c.l.b16 %v697
        %v1073 = vunpack.c.l.b16 %v698
        %v1074 = vunpack.c.l.b16 %v699
        %v1075 = vunpack.c.l.b16 %v700
        %v1076 = vunpack.c.l.b16 %v701
        %v1077 = vunpack.c.l.b16 %v702
        %v1078 = vunpack.c.l.b16 %v703
        %v1079 = vunpack.c.l.b16 %v704
        %v1080 = vpack.c.b16 %v1001, %v1000
        %v1081 = vpack.c.b16 %v1003, %v1002
        %v1082 = vpack.c.b16 %v1005, %v1004
        %v1083 = vpack.c.b16 %v1007, %v1006
        %v1084 = vpack.c.b16 %v1009, %v1008
        %v1085 = vpack.c.b16 %v1011, %v1010
        %v1086 = vpack.c.b16 %v1013, %v1012
        %v1087 = vpack.c.b16 %v1015, %v1014
        %v1088 = vpack.c.b16 %v1017, %v1016
        %v1089 = vpack.c.b16 %v1019, %v1018
        %v1090 = vpack.c.b16 %v1021, %v1020
        %v1091 = vpack.c.b16 %v1023, %v1022
        %v1092 = vpack.c.b16 %v1025, %v1024
        %v1093 = vpack.c.b16 %v1027, %v1026
        %v1094 = vpack.c.b16 %v1029, %v1028
        %v1095 = vpack.c.b16 %v1031, %v1030
        %v1096 = vpack.c.b16 %v1033, %v1032
        %v1097 = vpack.c.b16 %v1035, %v1034
        %v1098 = vpack.c.b16 %v1037, %v1036
        %v1099 = vpack.c.b16 %v1039, %v1038
        %v1100 = vpack.c.b16 %v1041, %v1040
        %v1101 = vpack.c.b16 %v1043, %v1042
        %v1102 = vpack.c.b16 %v1045, %v1044
        %v1103 = vpack.c.b16 %v1047, %v1046
        %v1104 = vpack.c.b16 %v1049, %v1048
        %v1105 = vpack.c.b16 %v1051, %v1050
        %v1106 = vpack.c.b16 %v1053, %v1052
        %v1107 = vpack.c.b16 %v1055, %v1054
        %v1108 = vpack.c.b16 %v1057, %v1056
        %v1109 = vpack.c.b16 %v1059, %v1058
        %v1110 = vpack.c.b16 %v1061, %v1060
        %v1111 = vpack.c.b16 %v1063, %v1062
        %v1112 = vpack.c.b16 %v1065, %v1064
        %v1113 = vpack.c.b16 %v1067, %v1066
        %v1114 = vpack.c.b16 %v1069, %v1068
        %v1115 = vpack.c.b16 %v1071, %v1070
        %v1116 = vpack.c.b16 %v1073, %v1072
        %v1117 = vpack.c.b16 %v1075, %v1074
        %v1118 = vpack.c.b16 %v1077, %v1076
        %v1119 = vpack.c.b16 %v1079, %v1078
        %1160 = vmatprep.subr.bf16.mxu0 0
        %1161 = vmatpush1.bf16.msra.mxu0 %v1080
        %1162 = vmatprep.subr.bf16.mxu0 0
        %1163 = vmatpush1.bf16.msra.mxu0 %v1081
        %1164 = vmatprep.subr.bf16.mxu0 0
        %1165 = vmatpush1.bf16.msra.mxu0 %v1082
        %1166 = vmatprep.subr.bf16.mxu0 0
        %1167 = vmatpush1.bf16.msra.mxu0 %v1083
        %1168 = vmatprep.subr.bf16.mxu0 0
        %1169 = vmatpush1.bf16.msra.mxu0 %v1084
        %1170 = vmatprep.subr.bf16.mxu0 0
        %1171 = vmatpush1.bf16.msra.mxu0 %v1085
        %1172 = vmatprep.subr.bf16.mxu0 0
        %1173 = vmatpush1.bf16.msra.mxu0 %v1086
        %1174 = vmatprep.subr.bf16.mxu0 0
        %1175 = vmatpush1.bf16.msra.mxu0 %v1087
        %1176 = vmatprep.subr.bf16.mxu0 0
        %1177 = vmatpush1.bf16.msra.mxu0 %v1088
        %1178 = vmatprep.subr.bf16.mxu0 0
        %1179 = vmatpush1.bf16.msra.mxu0 %v1089
        %1180 = vmatprep.subr.bf16.mxu0 0
        %1181 = vmatpush1.bf16.msra.mxu0 %v1090
        %1182 = vmatprep.subr.bf16.mxu0 0
        %1183 = vmatpush1.bf16.msra.mxu0 %v1091
        %1184 = vmatprep.subr.bf16.mxu0 0
        %1185 = vmatpush1.bf16.msra.mxu0 %v1092
        %1186 = vmatprep.subr.bf16.mxu0 0
        %1187 = vmatpush1.bf16.msra.mxu0 %v1093
        %1188 = vmatprep.subr.bf16.mxu0 0
        %1189 = vmatpush1.bf16.msra.mxu0 %v1094
        %1190 = vmatprep.subr.bf16.mxu0 0
        %1191 = vmatpush1.bf16.msra.mxu0 %v1095
        %1192 = vmatprep.mubr.bf16.mxu0 %v841
        %1193 = vmatmul.mubr.bf16.gmra.mrb[0].mxu0 %v840
        %v1194 = vpop.f32.mrb[0].mxu0
        %v1195 = vadd.f32 %v710, %v1194
        %v1196 = vpop.f32.mrb[0].mxu0
        %v1197 = vpop.f32.mrb[0].mxu0
        %v1198 = vadd.f32 %v710, %v1197
        %v1199 = vpop.f32.mrb[0].mxu0
        %1200 = vmatprep.mubr.bf16.mxu0 %v846
        %1201 = vmatmul.mubr.bf16.gmra.mrb[0].mxu0 %v845
        %v1202 = vpop.f32.mrb[0].mxu0
        %v1203 = vadd.f32 %v710, %v1202
        %v1204 = vpop.f32.mrb[0].mxu0
        %v1205 = vpop.f32.mrb[0].mxu0
        %v1206 = vadd.f32 %v710, %v1205
        %v1207 = vpop.f32.mrb[0].mxu0
        %1208 = vmatprep.mubr.bf16.mxu0 %v851
        %1209 = vmatmul.mubr.bf16.gmra.mrb[0].mxu0 %v850
        %v1210 = vpop.f32.mrb[0].mxu0
        %v1211 = vadd.f32 %v710, %v1210
        %v1212 = vpop.f32.mrb[0].mxu0
        %v1213 = vpop.f32.mrb[0].mxu0
        %v1214 = vadd.f32 %v710, %v1213
        %v1215 = vpop.f32.mrb[0].mxu0
        %1216 = vmatprep.mubr.bf16.mxu0 %v856
        %1217 = vmatmul.mubr.bf16.gmra.mrb[0].mxu0 %v855
        %v1218 = vpop.f32.mrb[0].mxu0
        %v1219 = vadd.f32 %v710, %v1218
        %v1220 = vpop.f32.mrb[0].mxu0
        %v1221 = vpop.f32.mrb[0].mxu0
        %v1222 = vadd.f32 %v710, %v1221
        %v1223 = vpop.f32.mrb[0].mxu0
        %1224 = vmatprep.mubr.bf16.mxu0 %v861
        %1225 = vmatmul.mubr.bf16.gmra.mrb[0].mxu0 %v860
        %v1226 = vpop.f32.mrb[0].mxu0
        %v1227 = vadd.f32 %v710, %v1226
        %v1228 = vpop.f32.mrb[0].mxu0
        %v1229 = vpop.f32.mrb[0].mxu0
        %v1230 = vadd.f32 %v710, %v1229
        %v1231 = vpop.f32.mrb[0].mxu0
        %1232 = vmatprep.mubr.bf16.mxu0 %v866
        %1233 = vmatmul.mubr.bf16.gmra.mrb[0].mxu0 %v865
        %v1234 = vpop.f32.mrb[0].mxu0
        %v1235 = vadd.f32 %v710, %v1234
        %v1236 = vpop.f32.mrb[0].mxu0
        %v1237 = vpop.f32.mrb[0].mxu0
        %v1238 = vadd.f32 %v710, %v1237
        %v1239 = vpop.f32.mrb[0].mxu0
        %1240 = vmatprep.mubr.bf16.mxu0 %v871
        %1241 = vmatmul.mubr.bf16.gmra.mrb[0].mxu0 %v870
        %v1242 = vpop.f32.mrb[0].mxu0
        %v1243 = vadd.f32 %v710, %v1242
        %v1244 = vpop.f32.mrb[0].mxu0
        %v1245 = vpop.f32.mrb[0].mxu0
        %v1246 = vadd.f32 %v710, %v1245
        %v1247 = vpop.f32.mrb[0].mxu0
        %1248 = vmatprep.mubr.bf16.mxu0 %v876
        %1249 = vmatmul.mubr.bf16.gmra.mrb[0].mxu0 %v875
        %v1250 = vpop.f32.mrb[0].mxu0
        %v1251 = vadd.f32 %v710, %v1250
        %v1252 = vpop.f32.mrb[0].mxu0
        %v1253 = vpop.f32.mrb[0].mxu0
        %v1254 = vadd.f32 %v710, %v1253
        %v1255 = vpop.f32.mrb[0].mxu0
        %1256 = vdwg.mxu0
        %1257 = vmatprep.subr.bf16.mxu0 0
        %1258 = vmatpush1.bf16.msra.mxu0 %v1096
        %1259 = vmatprep.subr.bf16.mxu0 0
        %1260 = vmatpush1.bf16.msra.mxu0 %v1097
        %1261 = vmatprep.subr.bf16.mxu0 0
        %1262 = vmatpush1.bf16.msra.mxu0 %v1098
        %1263 = vmatprep.subr.bf16.mxu0 0
        %1264 = vmatpush1.bf16.msra.mxu0 %v1099
        %1265 = vmatprep.subr.bf16.mxu0 0
        %1266 = vmatpush1.bf16.msra.mxu0 %v1100
        %1267 = vmatprep.subr.bf16.mxu0 0
        %1268 = vmatpush1.bf16.msra.mxu0 %v1101
        %1269 = vmatprep.subr.bf16.mxu0 0
        %1270 = vmatpush1.bf16.msra.mxu0 %v1102
        %1271 = vmatprep.subr.bf16.mxu0 0
        %1272 = vmatpush1.bf16.msra.mxu0 %v1103
        %1273 = vmatprep.subr.bf16.mxu0 0
        %1274 = vmatpush1.bf16.msra.mxu0 %v1104
        %1275 = vmatprep.subr.bf16.mxu0 0
        %1276 = vmatpush1.bf16.msra.mxu0 %v1105
        %1277 = vmatprep.subr.bf16.mxu0 0
        %1278 = vmatpush1.bf16.msra.mxu0 %v1106
        %1279 = vmatprep.subr.bf16.mxu0 0
        %1280 = vmatpush1.bf16.msra.mxu0 %v1107
        %1281 = vmatprep.subr.bf16.mxu0 0
        %1282 = vmatpush1.bf16.msra.mxu0 %v1108
        %1283 = vmatprep.subr.bf16.mxu0 0
        %1284 = vmatpush1.bf16.msra.mxu0 %v1109
        %1285 = vmatprep.subr.bf16.mxu0 0
        %1286 = vmatpush1.bf16.msra.mxu0 %v1110
        %1287 = vmatprep.subr.bf16.mxu0 0
        %1288 = vmatpush1.bf16.msra.mxu0 %v1111
        %1289 = vmatprep.mubr.bf16.mxu0 %v843
        %1290 = vmatmul.mubr.bf16.gmra.mrb[0].mxu0 %v842
        %v1291 = vpop.f32.mrb[0].mxu0
        %v1292 = vadd.f32 %v1195, %v1291
        %v1293 = vpop.f32.mrb[0].mxu0
        %v1294 = vpop.f32.mrb[0].mxu0
        %v1295 = vadd.f32 %v1198, %v1294
        %v1296 = vpop.f32.mrb[0].mxu0
        %1297 = vmatprep.mubr.bf16.mxu0 %v848
        %1298 = vmatmul.mubr.bf16.gmra.mrb[0].mxu0 %v847
        %v1299 = vpop.f32.mrb[0].mxu0
        %v1300 = vadd.f32 %v1203, %v1299
        %v1301 = vpop.f32.mrb[0].mxu0
        %v1302 = vpop.f32.mrb[0].mxu0
        %v1303 = vadd.f32 %v1206, %v1302
        %v1304 = vpop.f32.mrb[0].mxu0
        %1305 = vmatprep.mubr.bf16.mxu0 %v853
        %1306 = vmatmul.mubr.bf16.gmra.mrb[0].mxu0 %v852
        %v1307 = vpop.f32.mrb[0].mxu0
        %v1308 = vadd.f32 %v1211, %v1307
        %v1309 = vpop.f32.mrb[0].mxu0
        %v1310 = vpop.f32.mrb[0].mxu0
        %v1311 = vadd.f32 %v1214, %v1310
        %v1312 = vpop.f32.mrb[0].mxu0
        %1313 = vmatprep.mubr.bf16.mxu0 %v858
        %1314 = vmatmul.mubr.bf16.gmra.mrb[0].mxu0 %v857
        %v1315 = vpop.f32.mrb[0].mxu0
        %v1316 = vadd.f32 %v1219, %v1315
        %v1317 = vpop.f32.mrb[0].mxu0
        %v1318 = vpop.f32.mrb[0].mxu0
        %v1319 = vadd.f32 %v1222, %v1318
        %v1320 = vpop.f32.mrb[0].mxu0
        %1321 = vmatprep.mubr.bf16.mxu0 %v863
        %1322 = vmatmul.mubr.bf16.gmra.mrb[0].mxu0 %v862
        %v1323 = vpop.f32.mrb[0].mxu0
        %v1324 = vadd.f32 %v1227, %v1323
        %v1325 = vpop.f32.mrb[0].mxu0
        %v1326 = vpop.f32.mrb[0].mxu0
        %v1327 = vadd.f32 %v1230, %v1326
        %v1328 = vpop.f32.mrb[0].mxu0
        %1329 = vmatprep.mubr.bf16.mxu0 %v868
        %1330 = vmatmul.mubr.bf16.gmra.mrb[0].mxu0 %v867
        %v1331 = vpop.f32.mrb[0].mxu0
        %v1332 = vadd.f32 %v1235, %v1331
        %v1333 = vpop.f32.mrb[0].mxu0
        %v1334 = vpop.f32.mrb[0].mxu0
        %v1335 = vadd.f32 %v1238, %v1334
        %v1336 = vpop.f32.mrb[0].mxu0
        %1337 = vmatprep.mubr.bf16.mxu0 %v873
        %1338 = vmatmul.mubr.bf16.gmra.mrb[0].mxu0 %v872
        %v1339 = vpop.f32.mrb[0].mxu0
        %v1340 = vadd.f32 %v1243, %v1339
        %v1341 = vpop.f32.mrb[0].mxu0
        %v1342 = vpop.f32.mrb[0].mxu0
        %v1343 = vadd.f32 %v1246, %v1342
        %v1344 = vpop.f32.mrb[0].mxu0
        %1345 = vmatprep.mubr.bf16.mxu0 %v878
        %1346 = vmatmul.mubr.bf16.gmra.mrb[0].mxu0 %v877
        %v1347 = vpop.f32.mrb[0].mxu0
        %v1348 = vadd.f32 %v1251, %v1347
        %v1349 = vpop.f32.mrb[0].mxu0
        %v1350 = vpop.f32.mrb[0].mxu0
        %v1351 = vadd.f32 %v1254, %v1350
        %v1352 = vpop.f32.mrb[0].mxu0
        %1353 = vdwg.mxu0
        %1354 = vmatprep.subr.bf16.mxu0 0
        %1355 = vmatpush1.bf16.msra.mxu0 %v1112
        %1356 = vmatprep.subr.bf16.mxu0 0
        %1357 = vmatpush1.bf16.msra.mxu0 %v1113
        %1358 = vmatprep.subr.bf16.mxu0 0
        %1359 = vmatpush1.bf16.msra.mxu0 %v1114
        %1360 = vmatprep.subr.bf16.mxu0 0
        %1361 = vmatpush1.bf16.msra.mxu0 %v1115
        %1362 = vmatprep.subr.bf16.mxu0 0
        %1363 = vmatpush1.bf16.msra.mxu0 %v1116
        %1364 = vmatprep.subr.bf16.mxu0 0
        %1365 = vmatpush1.bf16.msra.mxu0 %v1117
        %1366 = vmatprep.subr.bf16.mxu0 0
        %1367 = vmatpush1.bf16.msra.mxu0 %v1118
        %1368 = vmatprep.subr.bf16.mxu0 0
        %1369 = vmatpush1.bf16.msra.mxu0 %v1119
        %1370 = vmatprep.subr.bf16.mxu0 0
        %1371 = vmatpush1.bf16.msra.mxu0 0
        %1372 = vmatprep.subr.bf16.mxu0 0
        %1373 = vmatpush1.bf16.msra.mxu0 0
        %1374 = vmatprep.subr.bf16.mxu0 0
        %1375 = vmatpush1.bf16.msra.mxu0 0
        %1376 = vmatprep.subr.bf16.mxu0 0
        %1377 = vmatpush1.bf16.msra.mxu0 0
        %1378 = vmatprep.subr.bf16.mxu0 0
        %1379 = vmatpush1.bf16.msra.mxu0 0
        %1380 = vmatprep.subr.bf16.mxu0 0
        %1381 = vmatpush1.bf16.msra.mxu0 0
        %1382 = vmatprep.subr.bf16.mxu0 0
        %1383 = vmatpush1.bf16.msra.mxu0 0
        %1384 = vmatprep.subr.bf16.mxu0 0
        %1385 = vmatpush1.bf16.msra.mxu0 0
        %1386 = vmatprep.mubr.bf16.mxu0 0
        %1387 = vmatmul.mubr.bf16.gmra.mrb[0].mxu0 %v844
        %v1388 = vpop.f32.mrb[0].mxu0
        %v1389 = vadd.f32 %v1292, %v1388
        %v1390 = vpop.f32.mrb[0].mxu0
        %v1391 = vpop.f32.mrb[0].mxu0
        %v1392 = vadd.f32 %v1295, %v1391
        %v1393 = vpop.f32.mrb[0].mxu0
        %1394 = vmatprep.mubr.bf16.mxu0 0
        %1395 = vmatmul.mubr.bf16.gmra.mrb[0].mxu0 %v849
        %v1396 = vpop.f32.mrb[0].mxu0
        %v1397 = vadd.f32 %v1300, %v1396
        %v1398 = vpop.f32.mrb[0].mxu0
        %v1399 = vpop.f32.mrb[0].mxu0
        %v1400 = vadd.f32 %v1303, %v1399
        %v1401 = vpop.f32.mrb[0].mxu0
        %1402 = vmatprep.mubr.bf16.mxu0 0
        %1403 = vmatmul.mubr.bf16.gmra.mrb[0].mxu0 %v854
        %v1404 = vpop.f32.mrb[0].mxu0
        %v1405 = vadd.f32 %v1308, %v1404
        %v1406 = vpop.f32.mrb[0].mxu0
        %v1407 = vpop.f32.mrb[0].mxu0
        %v1408 = vadd.f32 %v1311, %v1407
        %v1409 = vpop.f32.mrb[0].mxu0
        %1410 = vmatprep.mubr.bf16.mxu0 0
        %1411 = vmatmul.mubr.bf16.gmra.mrb[0].mxu0 %v859
        %v1412 = vpop.f32.mrb[0].mxu0
        %v1413 = vadd.f32 %v1316, %v1412
        %v1414 = vpop.f32.mrb[0].mxu0
        %v1415 = vpop.f32.mrb[0].mxu0
        %v1416 = vadd.f32 %v1319, %v1415
        %v1417 = vpop.f32.mrb[0].mxu0
        %1418 = vmatprep.mubr.bf16.mxu0 0
        %1419 = vmatmul.mubr.bf16.gmra.mrb[0].mxu0 %v864
        %v1420 = vpop.f32.mrb[0].mxu0
        %v1421 = vadd.f32 %v1324, %v1420
        %v1422 = vpop.f32.mrb[0].mxu0
        %v1423 = vpop.f32.mrb[0].mxu0
        %v1424 = vadd.f32 %v1327, %v1423
        %v1425 = vpop.f32.mrb[0].mxu0
        %1426 = vmatprep.mubr.bf16.mxu0 0
        %1427 = vmatmul.mubr.bf16.gmra.mrb[0].mxu0 %v869
        %v1428 = vpop.f32.mrb[0].mxu0
        %v1429 = vadd.f32 %v1332, %v1428
        %v1430 = vpop.f32.mrb[0].mxu0
        %v1431 = vpop.f32.mrb[0].mxu0
        %v1432 = vadd.f32 %v1335, %v1431
        %v1433 = vpop.f32.mrb[0].mxu0
        %1434 = vmatprep.mubr.bf16.mxu0 0
        %1435 = vmatmul.mubr.bf16.gmra.mrb[0].mxu0 %v874
        %v1436 = vpop.f32.mrb[0].mxu0
        %v1437 = vadd.f32 %v1340, %v1436
        %v1438 = vpop.f32.mrb[0].mxu0
        %v1439 = vpop.f32.mrb[0].mxu0
        %v1440 = vadd.f32 %v1343, %v1439
        %v1441 = vpop.f32.mrb[0].mxu0
        %1442 = vmatprep.mubr.bf16.mxu0 0
        %1443 = vmatmul.mubr.bf16.gmra.mrb[0].mxu0 %v879
        %v1444 = vpop.f32.mrb[0].mxu0
        %v1445 = vadd.f32 %v1348, %v1444
        %v1446 = vpop.f32.mrb[0].mxu0
        %v1447 = vpop.f32.mrb[0].mxu0
        %v1448 = vadd.f32 %v1351, %v1447
        %v1449 = vpop.f32.mrb[0].mxu0
        %1450 = vdwg.mxu0
        %v1451 = vmax.f32 %v1389, 0.0
        %v1452 = vmax.f32 %v1392, 0.0
        %v1453 = vmax.f32 %v1397, 0.0
        %v1454 = vmax.f32 %v1400, 0.0
        %v1455 = vmax.f32 %v1405, 0.0
        %v1456 = vmax.f32 %v1408, 0.0
        %v1457 = vmax.f32 %v1413, 0.0
        %v1458 = vmax.f32 %v1416, 0.0
        %v1459 = vmax.f32 %v1421, 0.0
        %v1460 = vmax.f32 %v1424, 0.0
        %v1461 = vmax.f32 %v1429, 0.0
        %v1462 = vmax.f32 %v1432, 0.0
        %v1463 = vmax.f32 %v1437, 0.0
        %v1464 = vmax.f32 %v1440, 0.0
        %v1465 = vmax.f32 %v1445, 0.0
        %v1466 = vmax.f32 %v1448, 0.0
        %v1467 = vpack.c.bf16 %v1452, %v1451
        %v1468 = vpack.c.bf16 %v1454, %v1453
        %v1469 = vpack.c.bf16 %v1456, %v1455
        %v1470 = vpack.c.bf16 %v1458, %v1457
        %v1471 = vpack.c.bf16 %v1460, %v1459
        %v1472 = vpack.c.bf16 %v1462, %v1461
        %v1473 = vpack.c.bf16 %v1464, %v1463
        %v1474 = vpack.c.bf16 %v1466, %v1465
        %v1483 = vunpack.c.l.b16 %v1467
        %v1484 = vunpack.c.h.b16 %v1467
        %v1485 = vunpack.c.l.b16 %v1468
        %v1486 = vunpack.c.h.b16 %v1468
        %v1487 = vunpack.c.l.b16 %v1469
        %v1488 = vunpack.c.h.b16 %v1469
        %v1489 = vunpack.c.l.b16 %v1470
        %v1490 = vunpack.c.h.b16 %v1470
        %v1491 = vunpack.c.l.b16 %v1471
        %v1492 = vunpack.c.h.b16 %v1471
        %v1493 = vunpack.c.l.b16 %v1472
        %v1494 = vunpack.c.h.b16 %v1472
        %v1495 = vunpack.c.l.b16 %v1473
        %v1496 = vunpack.c.h.b16 %v1473
        %v1497 = vunpack.c.l.b16 %v1474
        %v1498 = vunpack.c.h.b16 %v1474
        %v1499 = vpack.c.b16 %v1483, %v1483
        %v1500 = vpack.c.b16 %v1484, %v1484
        %v1501 = vpack.c.b16 %v1485, %v1485
        %v1502 = vpack.c.b16 %v1486, %v1486
        %v1503 = vpack.c.b16 %v1487, %v1487
        %v1504 = vpack.c.b16 %v1488, %v1488
        %v1505 = vpack.c.b16 %v1489, %v1489
        %v1506 = vpack.c.b16 %v1490, %v1490
        %v1507 = vpack.c.b16 %v1491, %v1491
        %v1508 = vpack.c.b16 %v1492, %v1492
        %v1509 = vpack.c.b16 %v1493, %v1493
        %v1510 = vpack.c.b16 %v1494, %v1494
        %v1511 = vpack.c.b16 %v1495, %v1495
        %v1512 = vpack.c.b16 %v1496, %v1496
        %v1513 = vpack.c.b16 %v1497, %v1497
        %v1514 = vpack.c.b16 %v1498, %v1498
        %1531 = vst [vmem:[%s564] sm:$0xf] %v1499
        %1532 = vst [vmem:[%s564 + $0x4] sm:$0xf] %v1500
        %1533 = vst [vmem:[%s564 + $0x8] sm:$0xf] %v1501
        %1534 = vst [vmem:[%s564 + $0xc] sm:$0xf] %v1502
        %1535 = vst [vmem:[%s564 + $0x10] sm:$0xf] %v1503
        %1536 = vst [vmem:[%s564 + $0x14] sm:$0xf] %v1504
        %1537 = vst [vmem:[%s564 + $0x18] sm:$0xf] %v1505
        %1538 = vst [vmem:[%s564 + $0x1c] sm:$0xf] %v1506
        %1539 = vst [vmem:[%s564 + $0x20] sm:$0xf] %v1507
        %1540 = vst [vmem:[%s564 + $0x24] sm:$0xf] %v1508
        %1541 = vst [vmem:[%s564 + $0x28] sm:$0xf] %v1509
        %1542 = vst [vmem:[%s564 + $0x2c] sm:$0xf] %v1510
        %1543 = vst [vmem:[%s564 + $0x30] sm:$0xf] %v1511
        %1544 = vst [vmem:[%s564 + $0x34] sm:$0xf] %v1512
        %1545 = vst [vmem:[%s564 + $0x38] sm:$0xf] %v1513
        %1546 = vst [vmem:[%s564 + $0x3c] sm:$0xf] %v1514
        %s1547 = sand.u32 %s114, 1
        %s1548 = sand.u32 %s114, 1
        %s1549 = smul.addr %s1548, 64
        %s1550 = scalar_lea.vmem [#allocation3], %s1549
        // Predicated region
        $region74: #{_lambda_.5} parent=68 // pred_check
          %p1551 = pneg %p124
        $region75: #{_lambda_.5} parent=68 // pred_check_branch
          %1553 = sbr.rel (%p1551) target = $region77
        $region76: #{_lambda_.5} parent=68 // pred_region
          %s1554 = smul.u32 16, %s18
          %s1555 = smul.addr %s1554, 2
          %s1556 = sadd.s32 %s19, %s1555
          %s1557 = smul.addr %s1556, 4
          %s1558 = scalar_lea.vmem %s3, %s1557
          // Predicated region
          $region78: #{_lambda_.5} parent=76 // pred_check
            _
          $region79: #{_lambda_.5} parent=76 // pred_check_branch
            %1560 = sbr.rel (0) target = $region81
          $region80: #{_lambda_.5} parent=76 // pred_region
            // Predicated region
            $region82: #{_lambda_.5} parent=80 // pred_check
              _
            $region83: #{_lambda_.5} parent=80 // pred_check_branch
              %1562 = sbr.rel target = $region85
            $region84: #{_lambda_.5} parent=80 // pred_region
              // Predicated region
              $region97: #{_lambda_.5} parent=84 // pred_check
                _
              $region98: #{_lambda_.5} parent=84 // pred_check_branch
                %1607 = sbr.rel (0) target = $region100
              $region99: #{_lambda_.5} parent=84 // pred_region
                loop: start=0, step=1, limit=1
                $region101: #{_lambda_.5} parent=99 // loop_pre_header
                  _
                $region102: #{_lambda_.5} parent=99 // loop_header
                  %s1609 = sphi 0, %s1613
                  %p1610 = scmp.ge.s32.totalorder %s1609, 1
                  %s1614 = sphi %s1550, %s1550
                  %s1615 = sphi %s1558, %s1558
                $region103: #{_lambda_.5} parent=99 // loop_header_branch
                  %1612 = sbr.rel (%p1610) target = $region107
                $region104: #{_lambda_.5} parent=99 // loop_body
                  _
                $region105: #{_lambda_.5} parent=99 // loop_footer
                  %s1613 = sadd.s32 1, %s1609
                $region106: #{_lambda_.5} parent=99 // loop_footer_branch
                  %1608 = sbr.rel target = $region102
                $region107: #{_lambda_.5} parent=99 // loop_exit
                  _
                loop: start=0, step=1, limit=1
                $region108: #{_lambda_.5} parent=99 // loop_pre_header
                  _
                $region109: #{_lambda_.5} parent=99 // loop_header
                  %s1618 = sphi 0, %s1622
                  %p1619 = scmp.ge.s32.totalorder %s1618, 1
                  %s1623 = sphi %s1550, %s1550
                  %s1624 = sphi %s1558, %s1558
                $region110: #{_lambda_.5} parent=99 // loop_header_branch
                  %1621 = sbr.rel (%p1619) target = $region114
                $region111: #{_lambda_.5} parent=99 // loop_body
                  %v1625 = vld [vmem:[%s1623] sm:$0xf]
                  %1626 = vst [vmem:[%s1624] sm:$0xf] %v1625
                  %v1627 = vld [vmem:[%s1623 + $0x4] sm:$0xf]
                  %1628 = vst [vmem:[%s1624 + $0x8] sm:$0xf] %v1627
                  %v1629 = vld [vmem:[%s1623 + $0x8] sm:$0xf]
                  %1630 = vst [vmem:[%s1624 + $0x10] sm:$0xf] %v1629
                  %v1631 = vld [vmem:[%s1623 + $0xc] sm:$0xf]
                  %1632 = vst [vmem:[%s1624 + $0x18] sm:$0xf] %v1631
                  %v1633 = vld [vmem:[%s1623 + $0x10] sm:$0xf]
                  %1634 = vst [vmem:[%s1624 + $0x20] sm:$0xf] %v1633
                  %v1635 = vld [vmem:[%s1623 + $0x14] sm:$0xf]
                  %1636 = vst [vmem:[%s1624 + $0x28] sm:$0xf] %v1635
                  %v1637 = vld [vmem:[%s1623 + $0x18] sm:$0xf]
                  %1638 = vst [vmem:[%s1624 + $0x30] sm:$0xf] %v1637
                  %v1639 = vld [vmem:[%s1623 + $0x1c] sm:$0xf]
                  %1640 = vst [vmem:[%s1624 + $0x38] sm:$0xf] %v1639
                  %v1641 = vld [vmem:[%s1623 + $0x20] sm:$0xf]
                  %1642 = vst [vmem:[%s1624 + $0x40] sm:$0xf] %v1641
                  %v1643 = vld [vmem:[%s1623 + $0x24] sm:$0xf]
                  %1644 = vst [vmem:[%s1624 + $0x48] sm:$0xf] %v1643
                  %v1645 = vld [vmem:[%s1623 + $0x28] sm:$0xf]
                  %1646 = vst [vmem:[%s1624 + $0x50] sm:$0xf] %v1645
                  %v1647 = vld [vmem:[%s1623 + $0x2c] sm:$0xf]
                  %1648 = vst [vmem:[%s1624 + $0x58] sm:$0xf] %v1647
                  %v1649 = vld [vmem:[%s1623 + $0x30] sm:$0xf]
                  %1650 = vst [vmem:[%s1624 + $0x60] sm:$0xf] %v1649
                  %v1651 = vld [vmem:[%s1623 + $0x34] sm:$0xf]
                  %1652 = vst [vmem:[%s1624 + $0x68] sm:$0xf] %v1651
                  %v1653 = vld [vmem:[%s1623 + $0x38] sm:$0xf]
                  %1654 = vst [vmem:[%s1624 + $0x70] sm:$0xf] %v1653
                  %v1655 = vld [vmem:[%s1623 + $0x3c] sm:$0xf]
                  %1656 = vst [vmem:[%s1624 + $0x78] sm:$0xf] %v1655
                $region112: #{_lambda_.5} parent=99 // loop_footer
                  %s1622 = sadd.s32 1, %s1618
                $region113: #{_lambda_.5} parent=99 // loop_footer_branch
                  %1617 = sbr.rel target = $region109
                $region114: #{_lambda_.5} parent=99 // loop_exit
                  _
              $region100: #{_lambda_.5} parent=84 // pred_fallthru
                _
            $region85: #{_lambda_.5} parent=80 // pred_fallthru
              _
            // Predicated region
            $region86: #{_lambda_.5} parent=80 // pred_check
              _
            $region87: #{_lambda_.5} parent=80 // pred_check_branch
              %1564 = sbr.rel (0) target = $region89
            $region88: #{_lambda_.5} parent=80 // pred_region
              loop: start=0, step=1, limit=1
              $region90: #{_lambda_.5} parent=88 // loop_pre_header
                _
              $region91: #{_lambda_.5} parent=88 // loop_header
                %s1567 = sphi 0, %s1571
                %p1568 = scmp.ge.s32.totalorder %s1567, 1
                %s1572 = sphi %s1550, %s1550
                %s1573 = sphi %s1558, %s1558
              $region92: #{_lambda_.5} parent=88 // loop_header_branch
                %1570 = sbr.rel (%p1568) target = $region96
              $region93: #{_lambda_.5} parent=88 // loop_body
                %v1574 = vld [vmem:[%s1572] sm:$0xf]
                %1575 = vst [vmem:[%s1573] sm:$0xf] %v1574
                %v1576 = vld [vmem:[%s1572 + $0x4] sm:$0xf]
                %1577 = vst [vmem:[%s1573 + $0x8] sm:$0xf] %v1576
                %v1578 = vld [vmem:[%s1572 + $0x8] sm:$0xf]
                %1579 = vst [vmem:[%s1573 + $0x10] sm:$0xf] %v1578
                %v1580 = vld [vmem:[%s1572 + $0xc] sm:$0xf]
                %1581 = vst [vmem:[%s1573 + $0x18] sm:$0xf] %v1580
                %v1582 = vld [vmem:[%s1572 + $0x10] sm:$0xf]
                %1583 = vst [vmem:[%s1573 + $0x20] sm:$0xf] %v1582
                %v1584 = vld [vmem:[%s1572 + $0x14] sm:$0xf]
                %1585 = vst [vmem:[%s1573 + $0x28] sm:$0xf] %v1584
                %v1586 = vld [vmem:[%s1572 + $0x18] sm:$0xf]
                %1587 = vst [vmem:[%s1573 + $0x30] sm:$0xf] %v1586
                %v1588 = vld [vmem:[%s1572 + $0x1c] sm:$0xf]
                %1589 = vst [vmem:[%s1573 + $0x38] sm:$0xf] %v1588
                %v1590 = vld [vmem:[%s1572 + $0x20] sm:$0xf]
                %1591 = vst [vmem:[%s1573 + $0x40] sm:$0xf] %v1590
                %v1592 = vld [vmem:[%s1572 + $0x24] sm:$0xf]
                %1593 = vst [vmem:[%s1573 + $0x48] sm:$0xf] %v1592
                %v1594 = vld [vmem:[%s1572 + $0x28] sm:$0xf]
                %1595 = vst [vmem:[%s1573 + $0x50] sm:$0xf] %v1594
                %v1596 = vld [vmem:[%s1572 + $0x2c] sm:$0xf]
                %1597 = vst [vmem:[%s1573 + $0x58] sm:$0xf] %v1596
                %v1598 = vld [vmem:[%s1572 + $0x30] sm:$0xf]
                %1599 = vst [vmem:[%s1573 + $0x60] sm:$0xf] %v1598
                %v1600 = vld [vmem:[%s1572 + $0x34] sm:$0xf]
                %1601 = vst [vmem:[%s1573 + $0x68] sm:$0xf] %v1600
                %v1602 = vld [vmem:[%s1572 + $0x38] sm:$0xf]
                %1603 = vst [vmem:[%s1573 + $0x70] sm:$0xf] %v1602
                %v1604 = vld [vmem:[%s1572 + $0x3c] sm:$0xf]
                %1605 = vst [vmem:[%s1573 + $0x78] sm:$0xf] %v1604
              $region94: #{_lambda_.5} parent=88 // loop_footer
                %s1571 = sadd.s32 1, %s1567
              $region95: #{_lambda_.5} parent=88 // loop_footer_branch
                %1566 = sbr.rel target = $region91
              $region96: #{_lambda_.5} parent=88 // loop_exit
                _
            $region89: #{_lambda_.5} parent=80 // pred_fallthru
              _
          $region81: #{_lambda_.5} parent=76 // pred_fallthru
            _
          %1657 = vnop
        $region77: #{_lambda_.5} parent=68 // pred_fallthru
          _
      $region69: #{_lambda_.5} parent=5 // pred_fallthru
        _
      %p1658 = scmp.le.s32.totalorder 2, %s9
      // Predicated region
      $region115: #{_lambda_.5} parent=5 // pred_check
        %p1659 = pneg %p1658
      $region116: #{_lambda_.5} parent=5 // pred_check_branch
        %1661 = sbr.rel (%p1659) target = $region118
      $region117: #{_lambda_.5} parent=5 // pred_region
        %s1662 = ssub.s32 %s9, 2
        // Predicated region
        $region119: #{_lambda_.5} parent=117 // pred_check
          %p1663 = pneg %p130
        $region120: #{_lambda_.5} parent=117 // pred_check_branch
          %1665 = sbr.rel (%p1663) target = $region122
        $region121: #{_lambda_.5} parent=117 // pred_region
          %s1666 = sand.u32 %s115, 1
          %s1667 = sand.u32 %s115, 1
          %s1668 = smul.addr %s1667, 64
          %s1669 = scalar_lea.vmem [#allocation3], %s1668
        $region122: #{_lambda_.5} parent=117 // pred_fallthru
          _
      $region118: #{_lambda_.5} parent=5 // pred_fallthru
        _
    $region6: #{_lambda_.5} parent=1 // loop_footer
      %s13 = sadd.s32 1, %s9
    $region7: #{_lambda_.5} parent=1 // loop_footer_branch
      %8 = sbr.rel target = $region3
    $region8: #{_lambda_.5} parent=1 // loop_exit
      _

</llo_original>
